<compile_context>
chip_gen: v7x
topology: tpu7x:2x2x1
jax: 0.10.0
libtpu: 0.0.40
codegen_flags: <defaults>
</compile_context>

<pallas_src>
import functools

import jax
import jax.numpy as jnp
from jax.experimental import pallas as pl
from jax.experimental.pallas import tpu as pltpu


def _make_attention_kernel(embed_size, heads, block_q):
    E = embed_size
    H = heads
    D = embed_size // heads

    def kernel(q_ref, k_ref, v_ref, bdq_ref, bdk_ref, bdv_ref, wfc_ref, b_ref,
               o_ref):
        # ---- project q / k / v for ALL heads with one E-deep matmul each --------
        # Block-diagonal weights (kron(I_H, W.T)) apply every head's (D, D)
        # projection at once; the 1/sqrt(E) scale is folded into bdq.
        # NOTE: k/v projections are recomputed per q-block; with q_blocks marked
        # "parallel" for megacore we must not rely on scratch written at qi == 0.
        qp = jnp.dot(q_ref[0], bdq_ref[...],
                     preferred_element_type=jnp.float32).astype(jnp.bfloat16)
        kp = jnp.dot(k_ref[0], bdk_ref[...],
                     preferred_element_type=jnp.float32).astype(jnp.bfloat16)
        vp = jnp.dot(v_ref[0], bdv_ref[...],
                     preferred_element_type=jnp.float32).astype(jnp.bfloat16)

        # Head selection as a lane mask over the packed (head, dim) feature axis.
        # Keeps every operand lane-dense (E = 256 wide); with E equal to the MXU
        # width/depth the masked full-E contraction costs the same MXU passes as a
        # D-deep one would.
        col = jax.lax.broadcasted_iota(jnp.int32, (1, E), 1)

        out_packed = jnp.zeros((block_q, E), jnp.float32)
        for h in range(H):                          # statically unrolled (H small)
            head_mask = ((col >= h * D) & (col < (h + 1) * D)).astype(jnp.bfloat16)
            qp_h = qp * head_mask                   # zero other heads' columns

            # energy[q, k] = sum_d qp_h[q, d] * kp[k, d]  (kp.T never materialized)
            energy = jax.lax.dot_general(
                qp_h, kp, (((1,), (1,)), ((), ())),
                preferred_element_type=jnp.float32)            # (block_q, Lk) f32

            # TODO(synk): optional attention mask (masked_fill -1e20) not plumbed
            # in; this forward is exercised with mask=None.
            # TODO(synk): for very long key_len add flash-style K-blocking with
            # online softmax so the (block_q, Lk) score matrix is never
            # materialized in full.

            # softmax over keys (f32; reciprocal on the EUP approx path).
            m = jnp.max(energy, axis=-1, keepdims=True)
            e = jnp.exp(energy - m)
            attn = e * pl.reciprocal(jnp.sum(e, axis=-1, keepdims=True),
                                     approx=True)

            av = jnp.dot(attn.astype(jnp.bfloat16), vp,
                         preferred_element_type=jnp.float32)   # (block_q, E) f32
            # Only this head's D columns of `av` are meaningful; mask and assemble
            # into packed (head, dim) order.
            out_packed = out_packed + av * head_mask.astype(jnp.float32)

        # ---- single E-deep fc_out matmul + bias, straight to the output block ---
        o_ref[0] = (jnp.dot(out_packed.astype(jnp.bfloat16), wfc_ref[...],
                            preferred_element_type=jnp.float32)
                    + b_ref[...])

    return kernel


def self_attention_pallas(values, keys, query, params, embed_size, heads,
                          block_q=None):
    """values/keys/query: (N, L, E) float32. Returns (N, Lq, E) float32."""
    N, Lq, E = query.shape
    Lk = keys.shape[1]
    Lv = values.shape[1]
    assert Lk == Lv, "key_len must equal value_len"
    D = embed_size // heads
    assert E == embed_size and heads * D == embed_size

    wq, wk, wv, wfc, bfc = params   # torch shapes: (D,D) x3, (E, H*D), (E,)

    # One-time host-side weight prep: pre-transposed, block-diagonalised, scale
    # folded into the query projection, bf16 for the MXU.
    eye = jnp.eye(heads, dtype=jnp.float32)
    inv_scale = 1.0 / (float(embed_size) ** 0.5)
    bdq = (jnp.kron(eye, wq.T) * inv_scale).astype(jnp.bfloat16)   # (E, E)
    bdk = jnp.kron(eye, wk.T).astype(jnp.bfloat16)                 # (E, E)
    bdv = jnp.kron(eye, wv.T).astype(jnp.bfloat16)                 # (E, E)
    wfc_t = jnp.transpose(wfc).astype(jnp.bfloat16)                # (H*D, E)
    bias = bfc.reshape(1, E).astype(jnp.float32)

    # Inputs: keep the (N, L, E) layout (no NHLD transpose), cast to bf16 once.
    q_bf = query.astype(jnp.bfloat16)
    k_bf = keys.astype(jnp.bfloat16)
    v_bf = values.astype(jnp.bfloat16)

    if block_q is None:
        block_q = min(Lq, 512)     # re-derive smaller for v7x / very long L if needed
    nq = pl.cdiv(Lq, block_q)

    kernel = _make_attention_kernel(E, heads, block_q)

    grid = (N, nq)
    out = pl.pallas_call(
        kernel,
        out_shape=jax.ShapeDtypeStruct((N, Lq, E), jnp.float32),
        grid_spec=pltpu.PrefetchScalarGridSpec(
            num_scalar_prefetch=0,
            grid=grid,
            in_specs=[
                pl.BlockSpec((1, block_q, E), lambda n, qi: (n, qi, 0)),  # q
                pl.BlockSpec((1, Lk, E), lambda n, qi: (n, 0, 0)),        # k (resident over qi)
                pl.BlockSpec((1, Lv, E), lambda n, qi: (n, 0, 0)),        # v (resident over qi)
                pl.BlockSpec((E, E), lambda n, qi: (0, 0)),               # block-diag Wq.T * scale
                pl.BlockSpec((E, E), lambda n, qi: (0, 0)),               # block-diag Wk.T
                pl.BlockSpec((E, E), lambda n, qi: (0, 0)),               # block-diag Wv.T
                pl.BlockSpec((E, E), lambda n, qi: (0, 0)),               # fc_out weight (pre-T)
                pl.BlockSpec((1, E), lambda n, qi: (0, 0)),               # fc_out bias
            ],
            out_specs=pl.BlockSpec((1, block_q, E), lambda n, qi: (n, qi, 0)),
        ),
        # batch and q-blocks both parallel -> megacore sharding even at N=1 when
        # nq > 1.  For large L/E on v7x, also pass vmem_limit_bytes and shrink
        # block_q.
        compiler_params=pltpu.CompilerParams(
            dimension_semantics=("parallel", "parallel")),
    )(q_bf, k_bf, v_bf, bdq, bdk, bdv, wfc_t, bias)
    return out


def self_attention_ref(values, keys, query, params, embed_size, heads):
    """Pure-JAX f32 reference mirroring the PyTorch forward exactly."""
    wq, wk, wv, wfc, bfc = params
    N, Lq, _ = query.shape
    D = embed_size // heads
    v = values.reshape(N, -1, heads, D) @ wv.T
    k = keys.reshape(N, -1, heads, D) @ wk.T
    q = query.reshape(N, -1, heads, D) @ wq.T
    energy = jnp.einsum('nqhd,nkhd->nhqk', q, k)
    attn = jax.nn.softmax(energy / (embed_size ** 0.5), axis=3)
    out = jnp.einsum('nhql,nlhd->nqhd', attn, v)
    out = out.reshape(N, Lq, heads * D)
    return out @ wfc.T + bfc


if __name__ == "__main__":
    # Module-consistent shapes: embed_size=256, heads=8 (head_dim=32), small batch/seq.
    N, L = 2, 8
    embed_size, heads = 256, 8
    D = embed_size // heads

    key = jax.random.PRNGKey(0)
    k_inputs, k_wq, k_wk, k_wv, k_wfc, k_bfc = jax.random.split(key, 6)
    kv, kk, kq = jax.random.split(k_inputs, 3)

    values = jax.random.normal(kv, (N, L, embed_size), dtype=jnp.float32)
    keys_x = jax.random.normal(kk, (N, L, embed_size), dtype=jnp.float32)
    query = jax.random.normal(kq, (N, L, embed_size), dtype=jnp.float32)

    # Deterministic parameter init (torch Linear shapes: (out_features, in_features)).
    wq = jax.random.normal(k_wq, (D, D), dtype=jnp.float32) * 0.1
    wk = jax.random.normal(k_wk, (D, D), dtype=jnp.float32) * 0.1
    wv = jax.random.normal(k_wv, (D, D), dtype=jnp.float32) * 0.1
    wfc = jax.random.normal(k_wfc, (embed_size, heads * D), dtype=jnp.float32) * 0.1
    bfc = jax.random.normal(k_bfc, (embed_size,), dtype=jnp.float32) * 0.1
    params = (wq, wk, wv, wfc, bfc)

    attn_fn = jax.jit(functools.partial(self_attention_pallas,
                                        embed_size=embed_size, heads=heads))
    out = attn_fn(values, keys_x, query, params)
    out = jax.block_until_ready(out)

    ref = self_attention_ref(values, keys_x, query, params, embed_size, heads)
    assert out.shape == (N, L, embed_size)
    # bf16 MXU operands (f32 accumulation) + approx reciprocal -> loosened tolerance
    # vs. the all-f32 reference.
    assert jnp.allclose(out, ref, atol=5e-2, rtol=5e-2), "mismatch vs reference"

    print("KERNEL_OK")
</pallas_src>

<mosaic_0001>
module attributes {stable_mosaic.version = 11 : i64} {
  func.func @kernel(%arg0: i32, %arg1: i32, %arg2: memref<1x8x256xbf16, #tpu.memory_space<vmem>>, %arg3: memref<1x8x256xbf16, #tpu.memory_space<vmem>>, %arg4: memref<1x8x256xbf16, #tpu.memory_space<vmem>>, %arg5: memref<256x256xbf16, #tpu.memory_space<vmem>>, %arg6: memref<256x256xbf16, #tpu.memory_space<vmem>>, %arg7: memref<256x256xbf16, #tpu.memory_space<vmem>>, %arg8: memref<256x256xbf16, #tpu.memory_space<vmem>>, %arg9: memref<1x256xf32, #tpu.memory_space<vmem>>, %arg10: memref<1x8x256xf32, #tpu.memory_space<vmem>>) attributes {dimension_semantics = [#tpu.dimension_semantics<parallel>, #tpu.dimension_semantics<parallel>], iteration_bounds = array<i64: 2, 1>, scalar_prefetch = 0 : i64, scratch_operands = 0 : i64, tpu.core_type = #tpu.core_type<tc>, window_params = [{transform_indices = @transform_0, window_bounds = array<i64: 1, 8, 256>}, {transform_indices = @transform_1, window_bounds = array<i64: 1, 8, 256>}, {transform_indices = @transform_2, window_bounds = array<i64: 1, 8, 256>}, {pipeline_mode = #tpu.pipeline_mode<synchronous>, transform_indices = @transform_3, window_bounds = array<i64: 256, 256>}, {pipeline_mode = #tpu.pipeline_mode<synchronous>, transform_indices = @transform_4, window_bounds = array<i64: 256, 256>}, {pipeline_mode = #tpu.pipeline_mode<synchronous>, transform_indices = @transform_5, window_bounds = array<i64: 256, 256>}, {pipeline_mode = #tpu.pipeline_mode<synchronous>, transform_indices = @transform_6, window_bounds = array<i64: 256, 256>}, {pipeline_mode = #tpu.pipeline_mode<synchronous>, transform_indices = @transform_7, window_bounds = array<i64: 1, 256>}, {transform_indices = @transform_8, window_bounds = array<i64: 1, 8, 256>}]} {
    %c0 = arith.constant 0 : index
    %c0_0 = arith.constant 0 : index
    %c0_1 = arith.constant 0 : index
    %0 = vector.load %arg2[%c0, %c0_0, %c0_1] : memref<1x8x256xbf16, #tpu.memory_space<vmem>>, vector<1x8x256xbf16>
    %1 = vector.shape_cast %0 : vector<1x8x256xbf16> to vector<8x256xbf16>
    %c0_2 = arith.constant 0 : index
    %c0_3 = arith.constant 0 : index
    %2 = vector.load %arg5[%c0_2, %c0_3] : memref<256x256xbf16, #tpu.memory_space<vmem>>, vector<256x256xbf16>
    %cst = arith.constant dense<0.000000e+00> : vector<8x256xf32>
    %3 = tpu.matmul %1, %2, %cst {dimension_numbers = #tpu.dot_dimension_numbers<[1], [0], [0], [1], [0, 0, 1, 1], [], []>} : vector<8x256xbf16>, vector<256x256xbf16>, vector<8x256xf32> -> vector<8x256xf32>
    %4 = arith.truncf %3 : vector<8x256xf32> to vector<8x256xbf16>
    %c0_4 = arith.constant 0 : index
    %c0_5 = arith.constant 0 : index
    %c0_6 = arith.constant 0 : index
    %5 = vector.load %arg3[%c0_4, %c0_5, %c0_6] : memref<1x8x256xbf16, #tpu.memory_space<vmem>>, vector<1x8x256xbf16>
    %6 = vector.shape_cast %5 : vector<1x8x256xbf16> to vector<8x256xbf16>
    %c0_7 = arith.constant 0 : index
    %c0_8 = arith.constant 0 : index
    %7 = vector.load %arg6[%c0_7, %c0_8] : memref<256x256xbf16, #tpu.memory_space<vmem>>, vector<256x256xbf16>
    %cst_9 = arith.constant dense<0.000000e+00> : vector<8x256xf32>
    %8 = tpu.matmul %6, %7, %cst_9 {dimension_numbers = #tpu.dot_dimension_numbers<[1], [0], [0], [1], [0, 0, 1, 1], [], []>} : vector<8x256xbf16>, vector<256x256xbf16>, vector<8x256xf32> -> vector<8x256xf32>
    %9 = arith.truncf %8 : vector<8x256xf32> to vector<8x256xbf16>
    %c0_10 = arith.constant 0 : index
    %c0_11 = arith.constant 0 : index
    %c0_12 = arith.constant 0 : index
    %10 = vector.load %arg4[%c0_10, %c0_11, %c0_12] : memref<1x8x256xbf16, #tpu.memory_space<vmem>>, vector<1x8x256xbf16>
    %11 = vector.shape_cast %10 : vector<1x8x256xbf16> to vector<8x256xbf16>
    %c0_13 = arith.constant 0 : index
    %c0_14 = arith.constant 0 : index
    %12 = vector.load %arg7[%c0_13, %c0_14] : memref<256x256xbf16, #tpu.memory_space<vmem>>, vector<256x256xbf16>
    %cst_15 = arith.constant dense<0.000000e+00> : vector<8x256xf32>
    %13 = tpu.matmul %11, %12, %cst_15 {dimension_numbers = #tpu.dot_dimension_numbers<[1], [0], [0], [1], [0, 0, 1, 1], [], []>} : vector<8x256xbf16>, vector<256x256xbf16>, vector<8x256xf32> -> vector<8x256xf32>
    %14 = arith.truncf %13 : vector<8x256xf32> to vector<8x256xbf16>
    %15 = tpu.iota {dimensions = array<i32: 1>} : vector<1x256xi32>
    %cst_16 = arith.constant 0.000000e+00 : f32
    %16 = vector.broadcast %cst_16 : f32 to vector<8x256xf32>
    %c0_i32 = arith.constant 0 : i32
    %17 = vector.broadcast %c0_i32 : i32 to vector<1x256xi32>
    %18 = arith.cmpi sge, %15, %17 : vector<1x256xi32>
    %c32_i32 = arith.constant 32 : i32
    %19 = vector.broadcast %c32_i32 : i32 to vector<1x256xi32>
    %20 = arith.cmpi slt, %15, %19 : vector<1x256xi32>
    %21 = arith.andi %18, %20 : vector<1x256xi1>
    %22 = arith.extui %21 : vector<1x256xi1> to vector<1x256xi32>
    %23 = arith.sitofp %22 : vector<1x256xi32> to vector<1x256xf32>
    %24 = arith.truncf %23 : vector<1x256xf32> to vector<1x256xbf16>
    %25 = vector.broadcast %24 : vector<1x256xbf16> to vector<8x256xbf16>
    %26 = arith.mulf %4, %25 : vector<8x256xbf16>
    %cst_17 = arith.constant dense<0.000000e+00> : vector<8x8xf32>
    %27 = tpu.matmul %26, %9, %cst_17 {dimension_numbers = #tpu.dot_dimension_numbers<[1], [1], [0], [0], [0, 0, 1, 0], [], []>} : vector<8x256xbf16>, vector<8x256xbf16>, vector<8x8xf32> -> vector<8x8xf32>
    %cst_18 = arith.constant dense<0xFF800000> : vector<8xf32>
    %28 = vector.multi_reduction <maximumf>, %27, %cst_18 [1] : vector<8x8xf32> to vector<8xf32>
    %29 = vector.shape_cast %28 : vector<8xf32> to vector<8x1xf32>
    %30 = vector.broadcast %29 : vector<8x1xf32> to vector<8x8xf32>
    %31 = arith.subf %27, %30 : vector<8x8xf32>
    %32 = math.exp %31 : vector<8x8xf32>
    %cst_19 = arith.constant dense<0.000000e+00> : vector<8xf32>
    %33 = vector.multi_reduction <add>, %32, %cst_19 [1] : vector<8x8xf32> to vector<8xf32>
    %34 = vector.shape_cast %33 : vector<8xf32> to vector<8x1xf32>
    %35 = tpu.reciprocal %34 {approx = true} : vector<8x1xf32> -> vector<8x1xf32>
    %36 = vector.broadcast %35 : vector<8x1xf32> to vector<8x8xf32>
    %37 = arith.mulf %32, %36 : vector<8x8xf32>
    %38 = arith.truncf %37 : vector<8x8xf32> to vector<8x8xbf16>
    %cst_20 = arith.constant dense<0.000000e+00> : vector<8x256xf32>
    %39 = tpu.matmul %38, %14, %cst_20 {dimension_numbers = #tpu.dot_dimension_numbers<[1], [0], [0], [1], [0, 0, 1, 1], [], []>} : vector<8x8xbf16>, vector<8x256xbf16>, vector<8x256xf32> -> vector<8x256xf32>
    %40 = arith.extf %24 : vector<1x256xbf16> to vector<1x256xf32>
    %41 = vector.broadcast %40 : vector<1x256xf32> to vector<8x256xf32>
    %42 = arith.mulf %39, %41 : vector<8x256xf32>
    %43 = arith.addf %16, %42 : vector<8x256xf32>
    %c32_i32_21 = arith.constant 32 : i32
    %44 = vector.broadcast %c32_i32_21 : i32 to vector<1x256xi32>
    %45 = arith.cmpi sge, %15, %44 : vector<1x256xi32>
    %c64_i32 = arith.constant 64 : i32
    %46 = vector.broadcast %c64_i32 : i32 to vector<1x256xi32>
    %47 = arith.cmpi slt, %15, %46 : vector<1x256xi32>
    %48 = arith.andi %45, %47 : vector<1x256xi1>
    %49 = arith.extui %48 : vector<1x256xi1> to vector<1x256xi32>
    %50 = arith.sitofp %49 : vector<1x256xi32> to vector<1x256xf32>
    %51 = arith.truncf %50 : vector<1x256xf32> to vector<1x256xbf16>
    %52 = vector.broadcast %51 : vector<1x256xbf16> to vector<8x256xbf16>
    %53 = arith.mulf %4, %52 : vector<8x256xbf16>
    %cst_22 = arith.constant dense<0.000000e+00> : vector<8x8xf32>
    %54 = tpu.matmul %53, %9, %cst_22 {dimension_numbers = #tpu.dot_dimension_numbers<[1], [1], [0], [0], [0, 0, 1, 0], [], []>} : vector<8x256xbf16>, vector<8x256xbf16>, vector<8x8xf32> -> vector<8x8xf32>
    %cst_23 = arith.constant dense<0xFF800000> : vector<8xf32>
    %55 = vector.multi_reduction <maximumf>, %54, %cst_23 [1] : vector<8x8xf32> to vector<8xf32>
    %56 = vector.shape_cast %55 : vector<8xf32> to vector<8x1xf32>
    %57 = vector.broadcast %56 : vector<8x1xf32> to vector<8x8xf32>
    %58 = arith.subf %54, %57 : vector<8x8xf32>
    %59 = math.exp %58 : vector<8x8xf32>
    %cst_24 = arith.constant dense<0.000000e+00> : vector<8xf32>
    %60 = vector.multi_reduction <add>, %59, %cst_24 [1] : vector<8x8xf32> to vector<8xf32>
    %61 = vector.shape_cast %60 : vector<8xf32> to vector<8x1xf32>
    %62 = tpu.reciprocal %61 {approx = true} : vector<8x1xf32> -> vector<8x1xf32>
    %63 = vector.broadcast %62 : vector<8x1xf32> to vector<8x8xf32>
    %64 = arith.mulf %59, %63 : vector<8x8xf32>
    %65 = arith.truncf %64 : vector<8x8xf32> to vector<8x8xbf16>
    %cst_25 = arith.constant dense<0.000000e+00> : vector<8x256xf32>
    %66 = tpu.matmul %65, %14, %cst_25 {dimension_numbers = #tpu.dot_dimension_numbers<[1], [0], [0], [1], [0, 0, 1, 1], [], []>} : vector<8x8xbf16>, vector<8x256xbf16>, vector<8x256xf32> -> vector<8x256xf32>
    %67 = arith.extf %51 : vector<1x256xbf16> to vector<1x256xf32>
    %68 = vector.broadcast %67 : vector<1x256xf32> to vector<8x256xf32>
    %69 = arith.mulf %66, %68 : vector<8x256xf32>
    %70 = arith.addf %43, %69 : vector<8x256xf32>
    %c64_i32_26 = arith.constant 64 : i32
    %71 = vector.broadcast %c64_i32_26 : i32 to vector<1x256xi32>
    %72 = arith.cmpi sge, %15, %71 : vector<1x256xi32>
    %c96_i32 = arith.constant 96 : i32
    %73 = vector.broadcast %c96_i32 : i32 to vector<1x256xi32>
    %74 = arith.cmpi slt, %15, %73 : vector<1x256xi32>
    %75 = arith.andi %72, %74 : vector<1x256xi1>
    %76 = arith.extui %75 : vector<1x256xi1> to vector<1x256xi32>
    %77 = arith.sitofp %76 : vector<1x256xi32> to vector<1x256xf32>
    %78 = arith.truncf %77 : vector<1x256xf32> to vector<1x256xbf16>
    %79 = vector.broadcast %78 : vector<1x256xbf16> to vector<8x256xbf16>
    %80 = arith.mulf %4, %79 : vector<8x256xbf16>
    %cst_27 = arith.constant dense<0.000000e+00> : vector<8x8xf32>
    %81 = tpu.matmul %80, %9, %cst_27 {dimension_numbers = #tpu.dot_dimension_numbers<[1], [1], [0], [0], [0, 0, 1, 0], [], []>} : vector<8x256xbf16>, vector<8x256xbf16>, vector<8x8xf32> -> vector<8x8xf32>
    %cst_28 = arith.constant dense<0xFF800000> : vector<8xf32>
    %82 = vector.multi_reduction <maximumf>, %81, %cst_28 [1] : vector<8x8xf32> to vector<8xf32>
    %83 = vector.shape_cast %82 : vector<8xf32> to vector<8x1xf32>
    %84 = vector.broadcast %83 : vector<8x1xf32> to vector<8x8xf32>
    %85 = arith.subf %81, %84 : vector<8x8xf32>
    %86 = math.exp %85 : vector<8x8xf32>
    %cst_29 = arith.constant dense<0.000000e+00> : vector<8xf32>
    %87 = vector.multi_reduction <add>, %86, %cst_29 [1] : vector<8x8xf32> to vector<8xf32>
    %88 = vector.shape_cast %87 : vector<8xf32> to vector<8x1xf32>
    %89 = tpu.reciprocal %88 {approx = true} : vector<8x1xf32> -> vector<8x1xf32>
    %90 = vector.broadcast %89 : vector<8x1xf32> to vector<8x8xf32>
    %91 = arith.mulf %86, %90 : vector<8x8xf32>
    %92 = arith.truncf %91 : vector<8x8xf32> to vector<8x8xbf16>
    %cst_30 = arith.constant dense<0.000000e+00> : vector<8x256xf32>
    %93 = tpu.matmul %92, %14, %cst_30 {dimension_numbers = #tpu.dot_dimension_numbers<[1], [0], [0], [1], [0, 0, 1, 1], [], []>} : vector<8x8xbf16>, vector<8x256xbf16>, vector<8x256xf32> -> vector<8x256xf32>
    %94 = arith.extf %78 : vector<1x256xbf16> to vector<1x256xf32>
    %95 = vector.broadcast %94 : vector<1x256xf32> to vector<8x256xf32>
    %96 = arith.mulf %93, %95 : vector<8x256xf32>
    %97 = arith.addf %70, %96 : vector<8x256xf32>
    %c96_i32_31 = arith.constant 96 : i32
    %98 = vector.broadcast %c96_i32_31 : i32 to vector<1x256xi32>
    %99 = arith.cmpi sge, %15, %98 : vector<1x256xi32>
    %c128_i32 = arith.constant 128 : i32
    %100 = vector.broadcast %c128_i32 : i32 to vector<1x256xi32>
    %101 = arith.cmpi slt, %15, %100 : vector<1x256xi32>
    %102 = arith.andi %99, %101 : vector<1x256xi1>
    %103 = arith.extui %102 : vector<1x256xi1> to vector<1x256xi32>
    %104 = arith.sitofp %103 : vector<1x256xi32> to vector<1x256xf32>
    %105 = arith.truncf %104 : vector<1x256xf32> to vector<1x256xbf16>
    %106 = vector.broadcast %105 : vector<1x256xbf16> to vector<8x256xbf16>
    %107 = arith.mulf %4, %106 : vector<8x256xbf16>
    %cst_32 = arith.constant dense<0.000000e+00> : vector<8x8xf32>
    %108 = tpu.matmul %107, %9, %cst_32 {dimension_numbers = #tpu.dot_dimension_numbers<[1], [1], [0], [0], [0, 0, 1, 0], [], []>} : vector<8x256xbf16>, vector<8x256xbf16>, vector<8x8xf32> -> vector<8x8xf32>
    %cst_33 = arith.constant dense<0xFF800000> : vector<8xf32>
    %109 = vector.multi_reduction <maximumf>, %108, %cst_33 [1] : vector<8x8xf32> to vector<8xf32>
    %110 = vector.shape_cast %109 : vector<8xf32> to vector<8x1xf32>
    %111 = vector.broadcast %110 : vector<8x1xf32> to vector<8x8xf32>
    %112 = arith.subf %108, %111 : vector<8x8xf32>
    %113 = math.exp %112 : vector<8x8xf32>
    %cst_34 = arith.constant dense<0.000000e+00> : vector<8xf32>
    %114 = vector.multi_reduction <add>, %113, %cst_34 [1] : vector<8x8xf32> to vector<8xf32>
    %115 = vector.shape_cast %114 : vector<8xf32> to vector<8x1xf32>
    %116 = tpu.reciprocal %115 {approx = true} : vector<8x1xf32> -> vector<8x1xf32>
    %117 = vector.broadcast %116 : vector<8x1xf32> to vector<8x8xf32>
    %118 = arith.mulf %113, %117 : vector<8x8xf32>
    %119 = arith.truncf %118 : vector<8x8xf32> to vector<8x8xbf16>
    %cst_35 = arith.constant dense<0.000000e+00> : vector<8x256xf32>
    %120 = tpu.matmul %119, %14, %cst_35 {dimension_numbers = #tpu.dot_dimension_numbers<[1], [0], [0], [1], [0, 0, 1, 1], [], []>} : vector<8x8xbf16>, vector<8x256xbf16>, vector<8x256xf32> -> vector<8x256xf32>
    %121 = arith.extf %105 : vector<1x256xbf16> to vector<1x256xf32>
    %122 = vector.broadcast %121 : vector<1x256xf32> to vector<8x256xf32>
    %123 = arith.mulf %120, %122 : vector<8x256xf32>
    %124 = arith.addf %97, %123 : vector<8x256xf32>
    %c128_i32_36 = arith.constant 128 : i32
    %125 = vector.broadcast %c128_i32_36 : i32 to vector<1x256xi32>
    %126 = arith.cmpi sge, %15, %125 : vector<1x256xi32>
    %c160_i32 = arith.constant 160 : i32
    %127 = vector.broadcast %c160_i32 : i32 to vector<1x256xi32>
    %128 = arith.cmpi slt, %15, %127 : vector<1x256xi32>
    %129 = arith.andi %126, %128 : vector<1x256xi1>
    %130 = arith.extui %129 : vector<1x256xi1> to vector<1x256xi32>
    %131 = arith.sitofp %130 : vector<1x256xi32> to vector<1x256xf32>
    %132 = arith.truncf %131 : vector<1x256xf32> to vector<1x256xbf16>
    %133 = vector.broadcast %132 : vector<1x256xbf16> to vector<8x256xbf16>
    %134 = arith.mulf %4, %133 : vector<8x256xbf16>
    %cst_37 = arith.constant dense<0.000000e+00> : vector<8x8xf32>
    %135 = tpu.matmul %134, %9, %cst_37 {dimension_numbers = #tpu.dot_dimension_numbers<[1], [1], [0], [0], [0, 0, 1, 0], [], []>} : vector<8x256xbf16>, vector<8x256xbf16>, vector<8x8xf32> -> vector<8x8xf32>
    %cst_38 = arith.constant dense<0xFF800000> : vector<8xf32>
    %136 = vector.multi_reduction <maximumf>, %135, %cst_38 [1] : vector<8x8xf32> to vector<8xf32>
    %137 = vector.shape_cast %136 : vector<8xf32> to vector<8x1xf32>
    %138 = vector.broadcast %137 : vector<8x1xf32> to vector<8x8xf32>
    %139 = arith.subf %135, %138 : vector<8x8xf32>
    %140 = math.exp %139 : vector<8x8xf32>
    %cst_39 = arith.constant dense<0.000000e+00> : vector<8xf32>
    %141 = vector.multi_reduction <add>, %140, %cst_39 [1] : vector<8x8xf32> to vector<8xf32>
    %142 = vector.shape_cast %141 : vector<8xf32> to vector<8x1xf32>
    %143 = tpu.reciprocal %142 {approx = true} : vector<8x1xf32> -> vector<8x1xf32>
    %144 = vector.broadcast %143 : vector<8x1xf32> to vector<8x8xf32>
    %145 = arith.mulf %140, %144 : vector<8x8xf32>
    %146 = arith.truncf %145 : vector<8x8xf32> to vector<8x8xbf16>
    %cst_40 = arith.constant dense<0.000000e+00> : vector<8x256xf32>
    %147 = tpu.matmul %146, %14, %cst_40 {dimension_numbers = #tpu.dot_dimension_numbers<[1], [0], [0], [1], [0, 0, 1, 1], [], []>} : vector<8x8xbf16>, vector<8x256xbf16>, vector<8x256xf32> -> vector<8x256xf32>
    %148 = arith.extf %132 : vector<1x256xbf16> to vector<1x256xf32>
    %149 = vector.broadcast %148 : vector<1x256xf32> to vector<8x256xf32>
    %150 = arith.mulf %147, %149 : vector<8x256xf32>
    %151 = arith.addf %124, %150 : vector<8x256xf32>
    %c160_i32_41 = arith.constant 160 : i32
    %152 = vector.broadcast %c160_i32_41 : i32 to vector<1x256xi32>
    %153 = arith.cmpi sge, %15, %152 : vector<1x256xi32>
    %c192_i32 = arith.constant 192 : i32
    %154 = vector.broadcast %c192_i32 : i32 to vector<1x256xi32>
    %155 = arith.cmpi slt, %15, %154 : vector<1x256xi32>
    %156 = arith.andi %153, %155 : vector<1x256xi1>
    %157 = arith.extui %156 : vector<1x256xi1> to vector<1x256xi32>
    %158 = arith.sitofp %157 : vector<1x256xi32> to vector<1x256xf32>
    %159 = arith.truncf %158 : vector<1x256xf32> to vector<1x256xbf16>
    %160 = vector.broadcast %159 : vector<1x256xbf16> to vector<8x256xbf16>
    %161 = arith.mulf %4, %160 : vector<8x256xbf16>
    %cst_42 = arith.constant dense<0.000000e+00> : vector<8x8xf32>
    %162 = tpu.matmul %161, %9, %cst_42 {dimension_numbers = #tpu.dot_dimension_numbers<[1], [1], [0], [0], [0, 0, 1, 0], [], []>} : vector<8x256xbf16>, vector<8x256xbf16>, vector<8x8xf32> -> vector<8x8xf32>
    %cst_43 = arith.constant dense<0xFF800000> : vector<8xf32>
    %163 = vector.multi_reduction <maximumf>, %162, %cst_43 [1] : vector<8x8xf32> to vector<8xf32>
    %164 = vector.shape_cast %163 : vector<8xf32> to vector<8x1xf32>
    %165 = vector.broadcast %164 : vector<8x1xf32> to vector<8x8xf32>
    %166 = arith.subf %162, %165 : vector<8x8xf32>
    %167 = math.exp %166 : vector<8x8xf32>
    %cst_44 = arith.constant dense<0.000000e+00> : vector<8xf32>
    %168 = vector.multi_reduction <add>, %167, %cst_44 [1] : vector<8x8xf32> to vector<8xf32>
    %169 = vector.shape_cast %168 : vector<8xf32> to vector<8x1xf32>
    %170 = tpu.reciprocal %169 {approx = true} : vector<8x1xf32> -> vector<8x1xf32>
    %171 = vector.broadcast %170 : vector<8x1xf32> to vector<8x8xf32>
    %172 = arith.mulf %167, %171 : vector<8x8xf32>
    %173 = arith.truncf %172 : vector<8x8xf32> to vector<8x8xbf16>
    %cst_45 = arith.constant dense<0.000000e+00> : vector<8x256xf32>
    %174 = tpu.matmul %173, %14, %cst_45 {dimension_numbers = #tpu.dot_dimension_numbers<[1], [0], [0], [1], [0, 0, 1, 1], [], []>} : vector<8x8xbf16>, vector<8x256xbf16>, vector<8x256xf32> -> vector<8x256xf32>
    %175 = arith.extf %159 : vector<1x256xbf16> to vector<1x256xf32>
    %176 = vector.broadcast %175 : vector<1x256xf32> to vector<8x256xf32>
    %177 = arith.mulf %174, %176 : vector<8x256xf32>
    %178 = arith.addf %151, %177 : vector<8x256xf32>
    %c192_i32_46 = arith.constant 192 : i32
    %179 = vector.broadcast %c192_i32_46 : i32 to vector<1x256xi32>
    %180 = arith.cmpi sge, %15, %179 : vector<1x256xi32>
    %c224_i32 = arith.constant 224 : i32
    %181 = vector.broadcast %c224_i32 : i32 to vector<1x256xi32>
    %182 = arith.cmpi slt, %15, %181 : vector<1x256xi32>
    %183 = arith.andi %180, %182 : vector<1x256xi1>
    %184 = arith.extui %183 : vector<1x256xi1> to vector<1x256xi32>
    %185 = arith.sitofp %184 : vector<1x256xi32> to vector<1x256xf32>
    %186 = arith.truncf %185 : vector<1x256xf32> to vector<1x256xbf16>
    %187 = vector.broadcast %186 : vector<1x256xbf16> to vector<8x256xbf16>
    %188 = arith.mulf %4, %187 : vector<8x256xbf16>
    %cst_47 = arith.constant dense<0.000000e+00> : vector<8x8xf32>
    %189 = tpu.matmul %188, %9, %cst_47 {dimension_numbers = #tpu.dot_dimension_numbers<[1], [1], [0], [0], [0, 0, 1, 0], [], []>} : vector<8x256xbf16>, vector<8x256xbf16>, vector<8x8xf32> -> vector<8x8xf32>
    %cst_48 = arith.constant dense<0xFF800000> : vector<8xf32>
    %190 = vector.multi_reduction <maximumf>, %189, %cst_48 [1] : vector<8x8xf32> to vector<8xf32>
    %191 = vector.shape_cast %190 : vector<8xf32> to vector<8x1xf32>
    %192 = vector.broadcast %191 : vector<8x1xf32> to vector<8x8xf32>
    %193 = arith.subf %189, %192 : vector<8x8xf32>
    %194 = math.exp %193 : vector<8x8xf32>
    %cst_49 = arith.constant dense<0.000000e+00> : vector<8xf32>
    %195 = vector.multi_reduction <add>, %194, %cst_49 [1] : vector<8x8xf32> to vector<8xf32>
    %196 = vector.shape_cast %195 : vector<8xf32> to vector<8x1xf32>
    %197 = tpu.reciprocal %196 {approx = true} : vector<8x1xf32> -> vector<8x1xf32>
    %198 = vector.broadcast %197 : vector<8x1xf32> to vector<8x8xf32>
    %199 = arith.mulf %194, %198 : vector<8x8xf32>
    %200 = arith.truncf %199 : vector<8x8xf32> to vector<8x8xbf16>
    %cst_50 = arith.constant dense<0.000000e+00> : vector<8x256xf32>
    %201 = tpu.matmul %200, %14, %cst_50 {dimension_numbers = #tpu.dot_dimension_numbers<[1], [0], [0], [1], [0, 0, 1, 1], [], []>} : vector<8x8xbf16>, vector<8x256xbf16>, vector<8x256xf32> -> vector<8x256xf32>
    %202 = arith.extf %186 : vector<1x256xbf16> to vector<1x256xf32>
    %203 = vector.broadcast %202 : vector<1x256xf32> to vector<8x256xf32>
    %204 = arith.mulf %201, %203 : vector<8x256xf32>
    %205 = arith.addf %178, %204 : vector<8x256xf32>
    %c224_i32_51 = arith.constant 224 : i32
    %206 = vector.broadcast %c224_i32_51 : i32 to vector<1x256xi32>
    %207 = arith.cmpi sge, %15, %206 : vector<1x256xi32>
    %c256_i32 = arith.constant 256 : i32
    %208 = vector.broadcast %c256_i32 : i32 to vector<1x256xi32>
    %209 = arith.cmpi slt, %15, %208 : vector<1x256xi32>
    %210 = arith.andi %207, %209 : vector<1x256xi1>
    %211 = arith.extui %210 : vector<1x256xi1> to vector<1x256xi32>
    %212 = arith.sitofp %211 : vector<1x256xi32> to vector<1x256xf32>
    %213 = arith.truncf %212 : vector<1x256xf32> to vector<1x256xbf16>
    %214 = vector.broadcast %213 : vector<1x256xbf16> to vector<8x256xbf16>
    %215 = arith.mulf %4, %214 : vector<8x256xbf16>
    %cst_52 = arith.constant dense<0.000000e+00> : vector<8x8xf32>
    %216 = tpu.matmul %215, %9, %cst_52 {dimension_numbers = #tpu.dot_dimension_numbers<[1], [1], [0], [0], [0, 0, 1, 0], [], []>} : vector<8x256xbf16>, vector<8x256xbf16>, vector<8x8xf32> -> vector<8x8xf32>
    %cst_53 = arith.constant dense<0xFF800000> : vector<8xf32>
    %217 = vector.multi_reduction <maximumf>, %216, %cst_53 [1] : vector<8x8xf32> to vector<8xf32>
    %218 = vector.shape_cast %217 : vector<8xf32> to vector<8x1xf32>
    %219 = vector.broadcast %218 : vector<8x1xf32> to vector<8x8xf32>
    %220 = arith.subf %216, %219 : vector<8x8xf32>
    %221 = math.exp %220 : vector<8x8xf32>
    %cst_54 = arith.constant dense<0.000000e+00> : vector<8xf32>
    %222 = vector.multi_reduction <add>, %221, %cst_54 [1] : vector<8x8xf32> to vector<8xf32>
    %223 = vector.shape_cast %222 : vector<8xf32> to vector<8x1xf32>
    %224 = tpu.reciprocal %223 {approx = true} : vector<8x1xf32> -> vector<8x1xf32>
    %225 = vector.broadcast %224 : vector<8x1xf32> to vector<8x8xf32>
    %226 = arith.mulf %221, %225 : vector<8x8xf32>
    %227 = arith.truncf %226 : vector<8x8xf32> to vector<8x8xbf16>
    %cst_55 = arith.constant dense<0.000000e+00> : vector<8x256xf32>
    %228 = tpu.matmul %227, %14, %cst_55 {dimension_numbers = #tpu.dot_dimension_numbers<[1], [0], [0], [1], [0, 0, 1, 1], [], []>} : vector<8x8xbf16>, vector<8x256xbf16>, vector<8x256xf32> -> vector<8x256xf32>
    %229 = arith.extf %213 : vector<1x256xbf16> to vector<1x256xf32>
    %230 = vector.broadcast %229 : vector<1x256xf32> to vector<8x256xf32>
    %231 = arith.mulf %228, %230 : vector<8x256xf32>
    %232 = arith.addf %205, %231 : vector<8x256xf32>
    %233 = arith.truncf %232 : vector<8x256xf32> to vector<8x256xbf16>
    %c0_56 = arith.constant 0 : index
    %c0_57 = arith.constant 0 : index
    %234 = vector.load %arg8[%c0_56, %c0_57] : memref<256x256xbf16, #tpu.memory_space<vmem>>, vector<256x256xbf16>
    %cst_58 = arith.constant dense<0.000000e+00> : vector<8x256xf32>
    %235 = tpu.matmul %233, %234, %cst_58 {dimension_numbers = #tpu.dot_dimension_numbers<[1], [0], [0], [1], [0, 0, 1, 1], [], []>} : vector<8x256xbf16>, vector<256x256xbf16>, vector<8x256xf32> -> vector<8x256xf32>
    %c0_59 = arith.constant 0 : index
    %c0_60 = arith.constant 0 : index
    %236 = vector.load %arg9[%c0_59, %c0_60] : memref<1x256xf32, #tpu.memory_space<vmem>>, vector<1x256xf32>
    %237 = vector.broadcast %236 : vector<1x256xf32> to vector<8x256xf32>
    %238 = arith.addf %235, %237 : vector<8x256xf32>
    %c0_61 = arith.constant 0 : index
    %c0_62 = arith.constant 0 : index
    %c0_63 = arith.constant 0 : index
    %239 = vector.load %arg10[%c0_61, %c0_62, %c0_63] : memref<1x8x256xf32, #tpu.memory_space<vmem>>, vector<1x8x256xf32>
    %240 = vector.shape_cast %239 : vector<1x8x256xf32> to vector<8x256xf32>
    %241 = vector.shape_cast %238 : vector<8x256xf32> to vector<1x8x256xf32>
    tpu.vector_store %arg10[%c0_61, %c0_62, %c0_63], %241 {strides = array<i32>} : memref<1x8x256xf32, #tpu.memory_space<vmem>>, vector<1x8x256xf32>,
    return
  }
  func.func @transform_0(%arg0: i32, %arg1: i32) -> (i32, i32, i32) {
    %c0_i32 = arith.constant 0 : i32
    %c0_i32_0 = arith.constant 0 : i32
    return %arg0, %arg1, %c0_i32 : i32, i32, i32
  }
  func.func @transform_1(%arg0: i32, %arg1: i32) -> (i32, i32, i32) {
    %c0_i32 = arith.constant 0 : i32
    %c0_i32_0 = arith.constant 0 : i32
    %c0_i32_1 = arith.constant 0 : i32
    return %arg0, %c0_i32, %c0_i32_0 : i32, i32, i32
  }
  func.func @transform_2(%arg0: i32, %arg1: i32) -> (i32, i32, i32) {
    %c0_i32 = arith.constant 0 : i32
    %c0_i32_0 = arith.constant 0 : i32
    %c0_i32_1 = arith.constant 0 : i32
    return %arg0, %c0_i32, %c0_i32_0 : i32, i32, i32
  }
  func.func @transform_3(%arg0: i32, %arg1: i32) -> (i32, i32) {
    %c0_i32 = arith.constant 0 : i32
    %c0_i32_0 = arith.constant 0 : i32
    %c0_i32_1 = arith.constant 0 : i32
    return %c0_i32, %c0_i32_0 : i32, i32
  }
  func.func @transform_4(%arg0: i32, %arg1: i32) -> (i32, i32) {
    %c0_i32 = arith.constant 0 : i32
    %c0_i32_0 = arith.constant 0 : i32
    %c0_i32_1 = arith.constant 0 : i32
    return %c0_i32, %c0_i32_0 : i32, i32
  }
  func.func @transform_5(%arg0: i32, %arg1: i32) -> (i32, i32) {
    %c0_i32 = arith.constant 0 : i32
    %c0_i32_0 = arith.constant 0 : i32
    %c0_i32_1 = arith.constant 0 : i32
    return %c0_i32, %c0_i32_0 : i32, i32
  }
  func.func @transform_6(%arg0: i32, %arg1: i32) -> (i32, i32) {
    %c0_i32 = arith.constant 0 : i32
    %c0_i32_0 = arith.constant 0 : i32
    %c0_i32_1 = arith.constant 0 : i32
    return %c0_i32, %c0_i32_0 : i32, i32
  }
  func.func @transform_7(%arg0: i32, %arg1: i32) -> (i32, i32) {
    %c0_i32 = arith.constant 0 : i32
    %c0_i32_0 = arith.constant 0 : i32
    %c0_i32_1 = arith.constant 0 : i32
    return %c0_i32, %c0_i32_0 : i32, i32
  }
  func.func @transform_8(%arg0: i32, %arg1: i32) -> (i32, i32, i32) {
    %c0_i32 = arith.constant 0 : i32
    %c0_i32_0 = arith.constant 0 : i32
    return %arg0, %arg1, %c0_i32 : i32, i32, i32
  }
}

</mosaic_0001>

<llo_original>
// kernel: self_attention_pallas.1
$region0: #{self_attention_pallas.1}
  #allocation0 [shape = 'u32[]', space=smem, size = 0x4, offset = 0x4, fixed_abs, tag = 'smem constant byte address 0x4 - core index']
  #allocation1 [shape = 'u32[144,128]{1,0:T(1,128)}', space=vmem, size = 0x12000, scoped, tag = 'internal scratch']
  %s0 = inlined_call_operand.vmem [shape: bf16[2,8,256], index: 0, kind: input, shape index: {}]
  %s1 = inlined_call_operand.vmem [shape: bf16[2,8,256], index: 1, kind: input, shape index: {}]
  %s2 = inlined_call_operand.vmem [shape: bf16[2,8,256], index: 2, kind: input, shape index: {}]
  %s3 = inlined_call_operand.vmem [shape: bf16[256,256], index: 3, kind: input, shape index: {}]
  %s4 = inlined_call_operand.vmem [shape: bf16[256,256], index: 4, kind: input, shape index: {}]
  %s5 = inlined_call_operand.vmem [shape: bf16[256,256], index: 5, kind: input, shape index: {}]
  %s6 = inlined_call_operand.vmem [shape: bf16[256,256], index: 6, kind: input, shape index: {}]
  %s7 = inlined_call_operand.vmem [shape: f32[1,256], index: 7, kind: input, shape index: {}]
  %s8 = inlined_call_operand.hbm [shape: f32[2,8,256], index: 8, kind: output, shape index: {}]
  %s9 = sld [smem:[#allocation0]]
  $region65: #{self_attention_pallas.1} parent=0
    _
  %s11 = ssub.s32 1, %s9
  %s12 = scalar_select 0, %s11, %s9
  $region1: #{self_attention_pallas.1} parent=0
    #allocation2 [shape = 'u8[16384]{0}', space=vmem, size = 0x4000, scoped, tag = 'output window, operand 0']
    #allocation3 [shape = 's32[2]{0}', space=sflag, size = 0x8, scoped, tag = 'scoped memory for self_attention_pallas.1']
    %13 = vsyncpa [#allocation3], 0
    %s14 = scalar_lea.sflag [#allocation3], 1
    %15 = vsyncpa %s14, 0
    loop: start=0, step=1, limit=4
    $region2: #{self_attention_pallas.1} parent=1 // loop_pre_header
      _
    $region3: #{self_attention_pallas.1} parent=1 // loop_header
      %s17 = sphi 0, %s21
      %p18 = scmp.ge.s32.totalorder %s17, 4
      %s24 = sphi 0, %s36
      %s25 = sphi 0, %s32
      %s26 = sphi 0, %s24
      %s27 = sphi 0, %s25
      %s28 = sphi 0, %s26
      %s29 = sphi 0, %s27
      %s41 = sphi 0, %s43
      %s44 = sphi 0, %s41
      %s45 = sphi 0, %s44
      %s61 = sphi 0, %s45
      %s67 = sphi 0, %s69
      %s70 = sphi 0, %s67
      %s71 = sphi 0, %s70
      %s87 = sphi 0, %s71
      %s93 = sphi 0, %s95
      %s96 = sphi 0, %s93
      %s97 = sphi 0, %s96
      %s113 = sphi 0, %s97
      %s117 = sphi 0, %s117
      %s119 = sphi 0, %s117
      %s120 = sphi 0, %s119
      %s134 = sphi 0, %s120
      %s138 = sphi 0, %s138
      %s140 = sphi 0, %s138
      %s141 = sphi 0, %s140
      %s155 = sphi 0, %s141
      %s159 = sphi 0, %s159
      %s161 = sphi 0, %s159
      %s162 = sphi 0, %s161
      %s176 = sphi 0, %s162
      %s180 = sphi 0, %s180
      %s182 = sphi 0, %s180
      %s183 = sphi 0, %s182
      %s197 = sphi 0, %s183
      %s201 = sphi 0, %s201
      %s203 = sphi 0, %s201
      %s204 = sphi 0, %s203
      %s218 = sphi 0, %s204
      %s226 = sphi 0, %s228
      %s229 = sphi 0, %s226
      %s230 = sphi 0, %s229
      %s246 = sphi 0, %s230
    $region4: #{self_attention_pallas.1} parent=1 // loop_header_branch
      %20 = sbr.rel (%p18) target = $region8
    $region5: #{self_attention_pallas.1} parent=1 // loop_body
      %s22 = ssub.s32 %s17, 1
      %s23 = ssub.s32 %s17, 2
      %s30 = sadd.s32 1, %s25
      %p31 = scmp.ge.s32.totalorder %s30, 1
      %s32 = scalar_select %p31, 0, %s30
      %s33 = sadd.s32 1, %s24
      %s34 = scalar_select %p31, %s33, %s24
      %p35 = scmp.ge.s32.totalorder %s34, 2
      %s36 = scalar_select %p35, 0, %s34
      %s37 = ssub.s32 %s24, %s36
      %s38 = ssub.s32 %s25, %s32
      %s39 = sor.u32 %s37, %s38
      %p40 = scmp.eq.s32.totalorder %s39, 0
      %s42 = sadd.s32 %s41, 1
      %s43 = scalar_select %p40, %s41, %s42
      %p46 = pneg %p40
      %p47 = scmp.eq.s32.totalorder %s17, 1
      %p48 = por %p46, %p47
      %p49 = scmp.ne.s32.totalorder %s41, %s44
      %p50 = scmp.eq.s32.totalorder %s17, 0
      %p51 = por %p49, %p50
      %p52 = scmp.ne.s32.totalorder %s41, %s44
      %p53 = scmp.eq.s32.totalorder %s22, 1
      %p54 = por %p52, %p53
      %p55 = scmp.ne.s32.totalorder %s44, %s45
      %p56 = scmp.eq.s32.totalorder %s22, 0
      %p57 = por %p55, %p56
      %p58 = scmp.ne.s32.totalorder %s44, %s45
      %p59 = scmp.eq.s32.totalorder %s23, 1
      %p60 = por %p58, %p59
      %p62 = scmp.ne.s32.totalorder %s45, %s61
      %p63 = scmp.eq.s32.totalorder %s23, 0
      %p64 = por %p62, %p63
      %s65 = ssub.s32 %s24, %s36
      %p66 = scmp.eq.s32.totalorder %s65, 0
      %s68 = sadd.s32 %s67, 1
      %s69 = scalar_select %p66, %s67, %s68
      %p72 = pneg %p66
      %p73 = scmp.eq.s32.totalorder %s17, 1
      %p74 = por %p72, %p73
      %p75 = scmp.ne.s32.totalorder %s67, %s70
      %p76 = scmp.eq.s32.totalorder %s17, 0
      %p77 = por %p75, %p76
      %p78 = scmp.ne.s32.totalorder %s67, %s70
      %p79 = scmp.eq.s32.totalorder %s22, 1
      %p80 = por %p78, %p79
      %p81 = scmp.ne.s32.totalorder %s70, %s71
      %p82 = scmp.eq.s32.totalorder %s22, 0
      %p83 = por %p81, %p82
      %p84 = scmp.ne.s32.totalorder %s70, %s71
      %p85 = scmp.eq.s32.totalorder %s23, 1
      %p86 = por %p84, %p85
      %p88 = scmp.ne.s32.totalorder %s71, %s87
      %p89 = scmp.eq.s32.totalorder %s23, 0
      %p90 = por %p88, %p89
      %s91 = ssub.s32 %s24, %s36
      %p92 = scmp.eq.s32.totalorder %s91, 0
      %s94 = sadd.s32 %s93, 1
      %s95 = scalar_select %p92, %s93, %s94
      %p98 = pneg %p92
      %p99 = scmp.eq.s32.totalorder %s17, 1
      %p100 = por %p98, %p99
      %p101 = scmp.ne.s32.totalorder %s93, %s96
      %p102 = scmp.eq.s32.totalorder %s17, 0
      %p103 = por %p101, %p102
      %p104 = scmp.ne.s32.totalorder %s93, %s96
      %p105 = scmp.eq.s32.totalorder %s22, 1
      %p106 = por %p104, %p105
      %p107 = scmp.ne.s32.totalorder %s96, %s97
      %p108 = scmp.eq.s32.totalorder %s22, 0
      %p109 = por %p107, %p108
      %p110 = scmp.ne.s32.totalorder %s96, %s97
      %p111 = scmp.eq.s32.totalorder %s23, 1
      %p112 = por %p110, %p111
      %p114 = scmp.ne.s32.totalorder %s97, %s113
      %p115 = scmp.eq.s32.totalorder %s23, 0
      %p116 = por %p114, %p115
      %s118 = sadd.s32 %s117, 1
      %p121 = scmp.eq.s32.totalorder %s17, 1
      %p122 = scmp.ne.s32.totalorder %s117, %s119
      %p123 = scmp.eq.s32.totalorder %s17, 0
      %p124 = por %p122, %p123
      %p125 = scmp.ne.s32.totalorder %s117, %s119
      %p126 = scmp.eq.s32.totalorder %s22, 1
      %p127 = por %p125, %p126
      %p128 = scmp.ne.s32.totalorder %s119, %s120
      %p129 = scmp.eq.s32.totalorder %s22, 0
      %p130 = por %p128, %p129
      %p131 = scmp.ne.s32.totalorder %s119, %s120
      %p132 = scmp.eq.s32.totalorder %s23, 1
      %p133 = por %p131, %p132
      %p135 = scmp.ne.s32.totalorder %s120, %s134
      %p136 = scmp.eq.s32.totalorder %s23, 0
      %p137 = por %p135, %p136
      %s139 = sadd.s32 %s138, 1
      %p142 = scmp.eq.s32.totalorder %s17, 1
      %p143 = scmp.ne.s32.totalorder %s138, %s140
      %p144 = scmp.eq.s32.totalorder %s17, 0
      %p145 = por %p143, %p144
      %p146 = scmp.ne.s32.totalorder %s138, %s140
      %p147 = scmp.eq.s32.totalorder %s22, 1
      %p148 = por %p146, %p147
      %p149 = scmp.ne.s32.totalorder %s140, %s141
      %p150 = scmp.eq.s32.totalorder %s22, 0
      %p151 = por %p149, %p150
      %p152 = scmp.ne.s32.totalorder %s140, %s141
      %p153 = scmp.eq.s32.totalorder %s23, 1
      %p154 = por %p152, %p153
      %p156 = scmp.ne.s32.totalorder %s141, %s155
      %p157 = scmp.eq.s32.totalorder %s23, 0
      %p158 = por %p156, %p157
      %s160 = sadd.s32 %s159, 1
      %p163 = scmp.eq.s32.totalorder %s17, 1
      %p164 = scmp.ne.s32.totalorder %s159, %s161
      %p165 = scmp.eq.s32.totalorder %s17, 0
      %p166 = por %p164, %p165
      %p167 = scmp.ne.s32.totalorder %s159, %s161
      %p168 = scmp.eq.s32.totalorder %s22, 1
      %p169 = por %p167, %p168
      %p170 = scmp.ne.s32.totalorder %s161, %s162
      %p171 = scmp.eq.s32.totalorder %s22, 0
      %p172 = por %p170, %p171
      %p173 = scmp.ne.s32.totalorder %s161, %s162
      %p174 = scmp.eq.s32.totalorder %s23, 1
      %p175 = por %p173, %p174
      %p177 = scmp.ne.s32.totalorder %s162, %s176
      %p178 = scmp.eq.s32.totalorder %s23, 0
      %p179 = por %p177, %p178
      %s181 = sadd.s32 %s180, 1
      %p184 = scmp.eq.s32.totalorder %s17, 1
      %p185 = scmp.ne.s32.totalorder %s180, %s182
      %p186 = scmp.eq.s32.totalorder %s17, 0
      %p187 = por %p185, %p186
      %p188 = scmp.ne.s32.totalorder %s180, %s182
      %p189 = scmp.eq.s32.totalorder %s22, 1
      %p190 = por %p188, %p189
      %p191 = scmp.ne.s32.totalorder %s182, %s183
      %p192 = scmp.eq.s32.totalorder %s22, 0
      %p193 = por %p191, %p192
      %p194 = scmp.ne.s32.totalorder %s182, %s183
      %p195 = scmp.eq.s32.totalorder %s23, 1
      %p196 = por %p194, %p195
      %p198 = scmp.ne.s32.totalorder %s183, %s197
      %p199 = scmp.eq.s32.totalorder %s23, 0
      %p200 = por %p198, %p199
      %s202 = sadd.s32 %s201, 1
      %p205 = scmp.eq.s32.totalorder %s17, 1
      %p206 = scmp.ne.s32.totalorder %s201, %s203
      %p207 = scmp.eq.s32.totalorder %s17, 0
      %p208 = por %p206, %p207
      %p209 = scmp.ne.s32.totalorder %s201, %s203
      %p210 = scmp.eq.s32.totalorder %s22, 1
      %p211 = por %p209, %p210
      %p212 = scmp.ne.s32.totalorder %s203, %s204
      %p213 = scmp.eq.s32.totalorder %s22, 0
      %p214 = por %p212, %p213
      %p215 = scmp.ne.s32.totalorder %s203, %s204
      %p216 = scmp.eq.s32.totalorder %s23, 1
      %p217 = por %p215, %p216
      %p219 = scmp.ne.s32.totalorder %s204, %s218
      %p220 = scmp.eq.s32.totalorder %s23, 0
      %p221 = por %p219, %p220
      %s222 = ssub.s32 %s24, %s36
      %s223 = ssub.s32 %s25, %s32
      %s224 = sor.u32 %s222, %s223
      %p225 = scmp.eq.s32.totalorder %s224, 0
      %s227 = sadd.s32 %s226, 1
      %s228 = scalar_select %p225, %s226, %s227
      %p231 = pneg %p225
      %p232 = scmp.eq.s32.totalorder %s17, 1
      %p233 = por %p231, %p232
      %p234 = scmp.ne.s32.totalorder %s226, %s229
      %p235 = scmp.eq.s32.totalorder %s17, 0
      %p236 = por %p234, %p235
      %p237 = scmp.ne.s32.totalorder %s226, %s229
      %p238 = scmp.eq.s32.totalorder %s22, 1
      %p239 = por %p237, %p238
      %p240 = scmp.ne.s32.totalorder %s229, %s230
      %p241 = scmp.eq.s32.totalorder %s22, 0
      %p242 = por %p240, %p241
      %p243 = scmp.ne.s32.totalorder %s229, %s230
      %p244 = scmp.eq.s32.totalorder %s23, 1
      %p245 = por %p243, %p244
      %p247 = scmp.ne.s32.totalorder %s230, %s246
      %p248 = scmp.eq.s32.totalorder %s23, 0
      %p249 = por %p247, %p248
      %p250 = scmp.le.s32.totalorder 1, %s17
      %p251 = scmp.lt.s32.totalorder %s17, 3
      %p252 = pnand %p250, %p251
      %p253 = pneg %p252
      // Predicated region
      $region9: #{self_attention_pallas.1} parent=5 // pred_check
        _
      $region10: #{self_attention_pallas.1} parent=5 // pred_check_branch
        %255 = sbr.rel (%p252) target = $region12
      $region11: #{self_attention_pallas.1} parent=5 // pred_region
        %s256 = ssub.s32 %s17, 1
        // Predicated region
        $region13: #{self_attention_pallas.1} parent=11 // pred_check
          %p257 = pneg %p130
        $region14: #{self_attention_pallas.1} parent=11 // pred_check_branch
          %259 = sbr.rel (%p257) target = $region16
        $region15: #{self_attention_pallas.1} parent=11 // pred_region
          _
        $region16: #{self_attention_pallas.1} parent=11 // pred_fallthru
          _
        // Predicated region
        $region17: #{self_attention_pallas.1} parent=11 // pred_check
          %p260 = pneg %p151
        $region18: #{self_attention_pallas.1} parent=11 // pred_check_branch
          %262 = sbr.rel (%p260) target = $region20
        $region19: #{self_attention_pallas.1} parent=11 // pred_region
          _
        $region20: #{self_attention_pallas.1} parent=11 // pred_fallthru
          _
        // Predicated region
        $region21: #{self_attention_pallas.1} parent=11 // pred_check
          %p263 = pneg %p172
        $region22: #{self_attention_pallas.1} parent=11 // pred_check_branch
          %265 = sbr.rel (%p263) target = $region24
        $region23: #{self_attention_pallas.1} parent=11 // pred_region
          _
        $region24: #{self_attention_pallas.1} parent=11 // pred_fallthru
          _
        // Predicated region
        $region25: #{self_attention_pallas.1} parent=11 // pred_check
          %p266 = pneg %p193
        $region26: #{self_attention_pallas.1} parent=11 // pred_check_branch
          %268 = sbr.rel (%p266) target = $region28
        $region27: #{self_attention_pallas.1} parent=11 // pred_region
          _
        $region28: #{self_attention_pallas.1} parent=11 // pred_fallthru
          _
        // Predicated region
        $region29: #{self_attention_pallas.1} parent=11 // pred_check
          %p269 = pneg %p214
        $region30: #{self_attention_pallas.1} parent=11 // pred_check_branch
          %271 = sbr.rel (%p269) target = $region32
        $region31: #{self_attention_pallas.1} parent=11 // pred_region
          _
        $region32: #{self_attention_pallas.1} parent=11 // pred_fallthru
          _
      $region12: #{self_attention_pallas.1} parent=5 // pred_fallthru
        _
      %p272 = scmp.lt.s32.totalorder %s17, 2
      // Predicated region
      $region33: #{self_attention_pallas.1} parent=5 // pred_check
        %p273 = pneg %p272
      $region34: #{self_attention_pallas.1} parent=5 // pred_check_branch
        %275 = sbr.rel (%p273) target = $region36
      $region35: #{self_attention_pallas.1} parent=5 // pred_region
        // Predicated region
        $region37: #{self_attention_pallas.1} parent=35 // pred_check
          %p276 = pneg %p51
        $region38: #{self_attention_pallas.1} parent=35 // pred_check_branch
          %278 = sbr.rel (%p276) target = $region40
        $region39: #{self_attention_pallas.1} parent=35 // pred_region
          %p279 = scmp.lt.s32.totalorder %s24, 1
          %s280 = scalar_select %p279, %s24, 1
          %p281 = scmp.lt.s32.totalorder %s25, 0
          %s282 = scalar_select %p281, %s25, 0
          %s283 = smul.addr %s282, 2
          %s284 = smul.addr %s280, 2
          %s285 = sadd.s32 %s283, %s284
          %s286 = smul.addr %s285, 4
          %s287 = scalar_lea.vmem %s0, %s286
        $region40: #{self_attention_pallas.1} parent=35 // pred_fallthru
          _
        // Predicated region
        $region41: #{self_attention_pallas.1} parent=35 // pred_check
          %p288 = pneg %p77
        $region42: #{self_attention_pallas.1} parent=35 // pred_check_branch
          %290 = sbr.rel (%p288) target = $region44
        $region43: #{self_attention_pallas.1} parent=35 // pred_region
          %p291 = scmp.lt.s32.totalorder %s24, 1
          %s292 = scalar_select %p291, %s24, 1
          %s293 = smul.addr %s292, 2
          %s294 = smul.addr %s293, 4
          %s295 = scalar_lea.vmem %s1, %s294
        $region44: #{self_attention_pallas.1} parent=35 // pred_fallthru
          _
        // Predicated region
        $region45: #{self_attention_pallas.1} parent=35 // pred_check
          %p296 = pneg %p103
        $region46: #{self_attention_pallas.1} parent=35 // pred_check_branch
          %298 = sbr.rel (%p296) target = $region48
        $region47: #{self_attention_pallas.1} parent=35 // pred_region
          %p299 = scmp.lt.s32.totalorder %s24, 1
          %s300 = scalar_select %p299, %s24, 1
          %s301 = smul.addr %s300, 2
          %s302 = smul.addr %s301, 4
          %s303 = scalar_lea.vmem %s2, %s302
        $region48: #{self_attention_pallas.1} parent=35 // pred_fallthru
          _
      $region36: #{self_attention_pallas.1} parent=5 // pred_fallthru
        _
      %p304 = scmp.le.s32.totalorder 1, %s17
      %p305 = scmp.lt.s32.totalorder %s17, 3
      %p306 = pnand %p304, %p305
      %p307 = pneg %p306
      // Predicated region
      $region49: #{self_attention_pallas.1} parent=5 // pred_check
        _
      $region50: #{self_attention_pallas.1} parent=5 // pred_check_branch
        %309 = sbr.rel (%p306) target = $region52
      $region51: #{self_attention_pallas.1} parent=5 // pred_region
        %s310 = ssub.s32 %s17, 1
        %p311 = scmp.lt.s32.totalorder %s26, 1
        %s312 = scalar_select %p311, %s26, 1
        %p313 = scmp.lt.s32.totalorder %s27, 0
        %s314 = scalar_select %p313, %s27, 0
        %s315 = smul.addr %s314, 2
        %s316 = smul.addr %s312, 2
        %s317 = sadd.s32 %s315, %s316
        %s318 = smul.addr %s317, 4
        %s319 = scalar_lea.vmem %s0, %s318
        %p320 = pneg %p57
        %p321 = pneg %p54
        %p322 = scmp.lt.s32.totalorder %s26, 1
        %s323 = scalar_select %p322, %s26, 1
        %s324 = smul.addr %s323, 2
        %s325 = smul.addr %s324, 4
        %s326 = scalar_lea.vmem %s1, %s325
        %p327 = pneg %p83
        %p328 = pneg %p80
        %p329 = scmp.lt.s32.totalorder %s26, 1
        %s330 = scalar_select %p329, %s26, 1
        %s331 = smul.addr %s330, 2
        %s332 = smul.addr %s331, 4
        %s333 = scalar_lea.vmem %s2, %s332
        %p334 = pneg %p109
        %p335 = pneg %p106
        %p336 = pneg %p130
        %p337 = pneg %p127
        %p338 = pneg %p151
        %p339 = pneg %p148
        %p340 = pneg %p172
        %p341 = pneg %p169
        %p342 = pneg %p193
        %p343 = pneg %p190
        %p344 = pneg %p214
        %p345 = pneg %p211
        %p346 = pneg %p242
        %p347 = pneg %p239
        %s348 = sand.u32 %s229, 1
        %s349 = scalar_lea.sflag [#allocation3], %s348
        %s350 = sand.u32 %s229, 1
        %s351 = smul.addr %s350, 16
        %s352 = scalar_lea.vmem [#allocation2], %s351
        %p353 = scmp.lt.s32.totalorder %s26, 1
        %s354 = scalar_select %p353, %s26, 1
        %p355 = scmp.lt.s32.totalorder %s27, 0
        %s356 = scalar_select %p355, %s27, 0
        %s357 = smul.addr %s356, 2
        %s358 = smul.addr %s354, 2
        %s359 = sadd.s32 %s357, %s358
        %s360 = smul.addr %s359, 4
        %s361 = scalar_lea.vmem %s0, %s360
        %p362 = scmp.lt.s32.totalorder %s26, 1
        %s363 = scalar_select %p362, %s26, 1
        %s364 = smul.addr %s363, 2
        %s365 = smul.addr %s364, 4
        %s366 = scalar_lea.vmem %s1, %s365
        %p367 = scmp.lt.s32.totalorder %s26, 1
        %s368 = scalar_select %p367, %s26, 1
        %s369 = smul.addr %s368, 2
        %s370 = smul.addr %s369, 4
        %s371 = scalar_lea.vmem %s2, %s370
        %v373 = vld [vmem:[%s361] sm:$0xff]
        %v374 = vld [vmem:[%s3] sm:$0xff]
        %v375 = vld [vmem:[%s3 + $0x8] sm:$0xff]
        %v376 = vld [vmem:[%s3 + $0x10] sm:$0xff]
        %v377 = vld [vmem:[%s3 + $0x18] sm:$0xff]
        %v378 = vld [vmem:[%s3 + $0x20] sm:$0xff]
        %v379 = vld [vmem:[%s3 + $0x28] sm:$0xff]
        %v380 = vld [vmem:[%s3 + $0x30] sm:$0xff]
        %v381 = vld [vmem:[%s3 + $0x38] sm:$0xff]
        %v382 = vld [vmem:[%s3 + $0x40] sm:$0xff]
        %v383 = vld [vmem:[%s3 + $0x48] sm:$0xff]
        %v384 = vld [vmem:[%s3 + $0x50] sm:$0xff]
        %v385 = vld [vmem:[%s3 + $0x58] sm:$0xff]
        %v386 = vld [vmem:[%s3 + $0x60] sm:$0xff]
        %v387 = vld [vmem:[%s3 + $0x68] sm:$0xff]
        %v388 = vld [vmem:[%s3 + $0x70] sm:$0xff]
        %v389 = vld [vmem:[%s3 + $0x78] sm:$0xff]
        %v390 = vld [vmem:[%s3 + $0x80] sm:$0xff]
        %v391 = vld [vmem:[%s3 + $0x88] sm:$0xff]
        %v392 = vld [vmem:[%s3 + $0x90] sm:$0xff]
        %v393 = vld [vmem:[%s3 + $0x98] sm:$0xff]
        %v394 = vld [vmem:[%s3 + $0xa0] sm:$0xff]
        %v395 = vld [vmem:[%s3 + $0xa8] sm:$0xff]
        %v396 = vld [vmem:[%s3 + $0xb0] sm:$0xff]
        %v397 = vld [vmem:[%s3 + $0xb8] sm:$0xff]
        %v398 = vld [vmem:[%s3 + $0xc0] sm:$0xff]
        %v399 = vld [vmem:[%s3 + $0xc8] sm:$0xff]
        %v400 = vld [vmem:[%s3 + $0xd0] sm:$0xff]
        %v401 = vld [vmem:[%s3 + $0xd8] sm:$0xff]
        %v402 = vld [vmem:[%s3 + $0xe0] sm:$0xff]
        %v403 = vld [vmem:[%s3 + $0xe8] sm:$0xff]
        %v404 = vld [vmem:[%s3 + $0xf0] sm:$0xff]
        %v405 = vld [vmem:[%s3 + $0xf8] sm:$0xff]
        %v407 = vunpack.c.l.b16 %v373
        %v408 = vunpack.c.h.b16 %v373
        %v409 = vpack.c.b16 %v407, %v407
        %v410 = vpack.c.b16 %v408, %v408
        %v445 = vunpack.c.l.b16 %v374
        %v446 = vunpack.c.h.b16 %v374
        %v447 = vunpack.c.l.b16 %v375
        %v448 = vunpack.c.h.b16 %v375
        %v449 = vunpack.c.l.b16 %v376
        %v450 = vunpack.c.h.b16 %v376
        %v451 = vunpack.c.l.b16 %v377
        %v452 = vunpack.c.h.b16 %v377
        %v453 = vunpack.c.l.b16 %v378
        %v454 = vunpack.c.h.b16 %v378
        %v455 = vunpack.c.l.b16 %v379
        %v456 = vunpack.c.h.b16 %v379
        %v457 = vunpack.c.l.b16 %v380
        %v458 = vunpack.c.h.b16 %v380
        %v459 = vunpack.c.l.b16 %v381
        %v460 = vunpack.c.h.b16 %v381
        %v461 = vunpack.c.l.b16 %v382
        %v462 = vunpack.c.h.b16 %v382
        %v463 = vunpack.c.l.b16 %v383
        %v464 = vunpack.c.h.b16 %v383
        %v465 = vunpack.c.l.b16 %v384
        %v466 = vunpack.c.h.b16 %v384
        %v467 = vunpack.c.l.b16 %v385
        %v468 = vunpack.c.h.b16 %v385
        %v469 = vunpack.c.l.b16 %v386
        %v470 = vunpack.c.h.b16 %v386
        %v471 = vunpack.c.l.b16 %v387
        %v472 = vunpack.c.h.b16 %v387
        %v473 = vunpack.c.l.b16 %v388
        %v474 = vunpack.c.h.b16 %v388
        %v475 = vunpack.c.l.b16 %v389
        %v476 = vunpack.c.h.b16 %v389
        %v477 = vunpack.c.l.b16 %v390
        %v478 = vunpack.c.h.b16 %v390
        %v479 = vunpack.c.l.b16 %v391
        %v480 = vunpack.c.h.b16 %v391
        %v481 = vunpack.c.l.b16 %v392
        %v482 = vunpack.c.h.b16 %v392
        %v483 = vunpack.c.l.b16 %v393
        %v484 = vunpack.c.h.b16 %v393
        %v485 = vunpack.c.l.b16 %v394
        %v486 = vunpack.c.h.b16 %v394
        %v487 = vunpack.c.l.b16 %v395
        %v488 = vunpack.c.h.b16 %v395
        %v489 = vunpack.c.l.b16 %v396
        %v490 = vunpack.c.h.b16 %v396
        %v491 = vunpack.c.l.b16 %v397
        %v492 = vunpack.c.h.b16 %v397
        %v493 = vunpack.c.l.b16 %v398
        %v494 = vunpack.c.h.b16 %v398
        %v495 = vunpack.c.l.b16 %v399
        %v496 = vunpack.c.h.b16 %v399
        %v497 = vunpack.c.l.b16 %v400
        %v498 = vunpack.c.h.b16 %v400
        %v499 = vunpack.c.l.b16 %v401
        %v500 = vunpack.c.h.b16 %v401
        %v501 = vunpack.c.l.b16 %v402
        %v502 = vunpack.c.h.b16 %v402
        %v503 = vunpack.c.l.b16 %v403
        %v504 = vunpack.c.h.b16 %v403
        %v505 = vunpack.c.l.b16 %v404
        %v506 = vunpack.c.h.b16 %v404
        %v507 = vunpack.c.l.b16 %v405
        %v508 = vunpack.c.h.b16 %v405
        %v509 = vpack.c.b16 %v447, %v445
        %v510 = vpack.c.b16 %v448, %v446
        %v511 = vpack.c.b16 %v451, %v449
        %v512 = vpack.c.b16 %v452, %v450
        %v513 = vpack.c.b16 %v455, %v453
        %v514 = vpack.c.b16 %v456, %v454
        %v515 = vpack.c.b16 %v459, %v457
        %v516 = vpack.c.b16 %v460, %v458
        %v517 = vpack.c.b16 %v463, %v461
        %v518 = vpack.c.b16 %v464, %v462
        %v519 = vpack.c.b16 %v467, %v465
        %v520 = vpack.c.b16 %v468, %v466
        %v521 = vpack.c.b16 %v471, %v469
        %v522 = vpack.c.b16 %v472, %v470
        %v523 = vpack.c.b16 %v475, %v473
        %v524 = vpack.c.b16 %v476, %v474
        %v525 = vpack.c.b16 %v479, %v477
        %v526 = vpack.c.b16 %v480, %v478
        %v527 = vpack.c.b16 %v483, %v481
        %v528 = vpack.c.b16 %v484, %v482
        %v529 = vpack.c.b16 %v487, %v485
        %v530 = vpack.c.b16 %v488, %v486
        %v531 = vpack.c.b16 %v491, %v489
        %v532 = vpack.c.b16 %v492, %v490
        %v533 = vpack.c.b16 %v495, %v493
        %v534 = vpack.c.b16 %v496, %v494
        %v535 = vpack.c.b16 %v499, %v497
        %v536 = vpack.c.b16 %v500, %v498
        %v537 = vpack.c.b16 %v503, %v501
        %v538 = vpack.c.b16 %v504, %v502
        %v539 = vpack.c.b16 %v507, %v505
        %v540 = vpack.c.b16 %v508, %v506
        %573 = vmatprep.subr.bf16.mxu0 %v510
        %574 = vmatpush1.bf16.msra.mxu0 %v509
        %575 = vmatprep.subr.bf16.mxu0 %v512
        %576 = vmatpush1.bf16.msra.mxu0 %v511
        %577 = vmatprep.subr.bf16.mxu0 %v514
        %578 = vmatpush1.bf16.msra.mxu0 %v513
        %579 = vmatprep.subr.bf16.mxu0 %v516
        %580 = vmatpush1.bf16.msra.mxu0 %v515
        %581 = vmatprep.subr.bf16.mxu0 %v518
        %582 = vmatpush1.bf16.msra.mxu0 %v517
        %583 = vmatprep.subr.bf16.mxu0 %v520
        %584 = vmatpush1.bf16.msra.mxu0 %v519
        %585 = vmatprep.subr.bf16.mxu0 %v522
        %586 = vmatpush1.bf16.msra.mxu0 %v521
        %587 = vmatprep.subr.bf16.mxu0 %v524
        %588 = vmatpush1.bf16.msra.mxu0 %v523
        %589 = vmatprep.subr.bf16.mxu0 %v526
        %590 = vmatpush1.bf16.msra.mxu0 %v525
        %591 = vmatprep.subr.bf16.mxu0 %v528
        %592 = vmatpush1.bf16.msra.mxu0 %v527
        %593 = vmatprep.subr.bf16.mxu0 %v530
        %594 = vmatpush1.bf16.msra.mxu0 %v529
        %595 = vmatprep.subr.bf16.mxu0 %v532
        %596 = vmatpush1.bf16.msra.mxu0 %v531
        %597 = vmatprep.subr.bf16.mxu0 %v534
        %598 = vmatpush1.bf16.msra.mxu0 %v533
        %599 = vmatprep.subr.bf16.mxu0 %v536
        %600 = vmatpush1.bf16.msra.mxu0 %v535
        %601 = vmatprep.subr.bf16.mxu0 %v538
        %602 = vmatpush1.bf16.msra.mxu0 %v537
        %603 = vmatprep.subr.bf16.mxu0 %v540
        %604 = vmatpush1.bf16.msra.mxu0 %v539
        %605 = vmatprep.mubr.bf16.mxu0 %v410
        %606 = vmatmul.mubr.bf16.gmra.mrb[0].mxu0 %v409
        %v607 = vpop.f32.mrb[0].mxu0
        %v608 = vadd.f32 0.0, %v607
        %v609 = vpop.f32.mrb[0].mxu0
        %v610 = vadd.f32 0.0, %v609
        %v611 = vpop.f32.mrb[0].mxu0
        %v612 = vpop.f32.mrb[0].mxu0
        %613 = vdwg.mxu0
        %v614 = vpack.c.bf16 %v608, %v608
        %v615 = vpack.c.bf16 %v610, %v610
        %v616 = vld [vmem:[%s366] sm:$0xff]
        %v617 = vld [vmem:[%s4] sm:$0xff]
        %v618 = vld [vmem:[%s4 + $0x8] sm:$0xff]
        %v619 = vld [vmem:[%s4 + $0x10] sm:$0xff]
        %v620 = vld [vmem:[%s4 + $0x18] sm:$0xff]
        %v621 = vld [vmem:[%s4 + $0x20] sm:$0xff]
        %v622 = vld [vmem:[%s4 + $0x28] sm:$0xff]
        %v623 = vld [vmem:[%s4 + $0x30] sm:$0xff]
        %v624 = vld [vmem:[%s4 + $0x38] sm:$0xff]
        %v625 = vld [vmem:[%s4 + $0x40] sm:$0xff]
        %v626 = vld [vmem:[%s4 + $0x48] sm:$0xff]
        %v627 = vld [vmem:[%s4 + $0x50] sm:$0xff]
        %v628 = vld [vmem:[%s4 + $0x58] sm:$0xff]
        %v629 = vld [vmem:[%s4 + $0x60] sm:$0xff]
        %v630 = vld [vmem:[%s4 + $0x68] sm:$0xff]
        %v631 = vld [vmem:[%s4 + $0x70] sm:$0xff]
        %v632 = vld [vmem:[%s4 + $0x78] sm:$0xff]
        %v633 = vld [vmem:[%s4 + $0x80] sm:$0xff]
        %v634 = vld [vmem:[%s4 + $0x88] sm:$0xff]
        %v635 = vld [vmem:[%s4 + $0x90] sm:$0xff]
        %v636 = vld [vmem:[%s4 + $0x98] sm:$0xff]
        %v637 = vld [vmem:[%s4 + $0xa0] sm:$0xff]
        %v638 = vld [vmem:[%s4 + $0xa8] sm:$0xff]
        %v639 = vld [vmem:[%s4 + $0xb0] sm:$0xff]
        %v640 = vld [vmem:[%s4 + $0xb8] sm:$0xff]
        %v641 = vld [vmem:[%s4 + $0xc0] sm:$0xff]
        %v642 = vld [vmem:[%s4 + $0xc8] sm:$0xff]
        %v643 = vld [vmem:[%s4 + $0xd0] sm:$0xff]
        %v644 = vld [vmem:[%s4 + $0xd8] sm:$0xff]
        %v645 = vld [vmem:[%s4 + $0xe0] sm:$0xff]
        %v646 = vld [vmem:[%s4 + $0xe8] sm:$0xff]
        %v647 = vld [vmem:[%s4 + $0xf0] sm:$0xff]
        %v648 = vld [vmem:[%s4 + $0xf8] sm:$0xff]
        %v650 = vunpack.c.l.b16 %v616
        %v651 = vunpack.c.h.b16 %v616
        %v652 = vpack.c.b16 %v650, %v650
        %v653 = vpack.c.b16 %v651, %v651
        %v688 = vunpack.c.l.b16 %v617
        %v689 = vunpack.c.h.b16 %v617
        %v690 = vunpack.c.l.b16 %v618
        %v691 = vunpack.c.h.b16 %v618
        %v692 = vunpack.c.l.b16 %v619
        %v693 = vunpack.c.h.b16 %v619
        %v694 = vunpack.c.l.b16 %v620
        %v695 = vunpack.c.h.b16 %v620
        %v696 = vunpack.c.l.b16 %v621
        %v697 = vunpack.c.h.b16 %v621
        %v698 = vunpack.c.l.b16 %v622
        %v699 = vunpack.c.h.b16 %v622
        %v700 = vunpack.c.l.b16 %v623
        %v701 = vunpack.c.h.b16 %v623
        %v702 = vunpack.c.l.b16 %v624
        %v703 = vunpack.c.h.b16 %v624
        %v704 = vunpack.c.l.b16 %v625
        %v705 = vunpack.c.h.b16 %v625
        %v706 = vunpack.c.l.b16 %v626
        %v707 = vunpack.c.h.b16 %v626
        %v708 = vunpack.c.l.b16 %v627
        %v709 = vunpack.c.h.b16 %v627
        %v710 = vunpack.c.l.b16 %v628
        %v711 = vunpack.c.h.b16 %v628
        %v712 = vunpack.c.l.b16 %v629
        %v713 = vunpack.c.h.b16 %v629
        %v714 = vunpack.c.l.b16 %v630
        %v715 = vunpack.c.h.b16 %v630
        %v716 = vunpack.c.l.b16 %v631
        %v717 = vunpack.c.h.b16 %v631
        %v718 = vunpack.c.l.b16 %v632
        %v719 = vunpack.c.h.b16 %v632
        %v720 = vunpack.c.l.b16 %v633
        %v721 = vunpack.c.h.b16 %v633
        %v722 = vunpack.c.l.b16 %v634
        %v723 = vunpack.c.h.b16 %v634
        %v724 = vunpack.c.l.b16 %v635
        %v725 = vunpack.c.h.b16 %v635
        %v726 = vunpack.c.l.b16 %v636
        %v727 = vunpack.c.h.b16 %v636
        %v728 = vunpack.c.l.b16 %v637
        %v729 = vunpack.c.h.b16 %v637
        %v730 = vunpack.c.l.b16 %v638
        %v731 = vunpack.c.h.b16 %v638
        %v732 = vunpack.c.l.b16 %v639
        %v733 = vunpack.c.h.b16 %v639
        %v734 = vunpack.c.l.b16 %v640
        %v735 = vunpack.c.h.b16 %v640
        %v736 = vunpack.c.l.b16 %v641
        %v737 = vunpack.c.h.b16 %v641
        %v738 = vunpack.c.l.b16 %v642
        %v739 = vunpack.c.h.b16 %v642
        %v740 = vunpack.c.l.b16 %v643
        %v741 = vunpack.c.h.b16 %v643
        %v742 = vunpack.c.l.b16 %v644
        %v743 = vunpack.c.h.b16 %v644
        %v744 = vunpack.c.l.b16 %v645
        %v745 = vunpack.c.h.b16 %v645
        %v746 = vunpack.c.l.b16 %v646
        %v747 = vunpack.c.h.b16 %v646
        %v748 = vunpack.c.l.b16 %v647
        %v749 = vunpack.c.h.b16 %v647
        %v750 = vunpack.c.l.b16 %v648
        %v751 = vunpack.c.h.b16 %v648
        %v752 = vpack.c.b16 %v690, %v688
        %v753 = vpack.c.b16 %v691, %v689
        %v754 = vpack.c.b16 %v694, %v692
        %v755 = vpack.c.b16 %v695, %v693
        %v756 = vpack.c.b16 %v698, %v696
        %v757 = vpack.c.b16 %v699, %v697
        %v758 = vpack.c.b16 %v702, %v700
        %v759 = vpack.c.b16 %v703, %v701
        %v760 = vpack.c.b16 %v706, %v704
        %v761 = vpack.c.b16 %v707, %v705
        %v762 = vpack.c.b16 %v710, %v708
        %v763 = vpack.c.b16 %v711, %v709
        %v764 = vpack.c.b16 %v714, %v712
        %v765 = vpack.c.b16 %v715, %v713
        %v766 = vpack.c.b16 %v718, %v716
        %v767 = vpack.c.b16 %v719, %v717
        %v768 = vpack.c.b16 %v722, %v720
        %v769 = vpack.c.b16 %v723, %v721
        %v770 = vpack.c.b16 %v726, %v724
        %v771 = vpack.c.b16 %v727, %v725
        %v772 = vpack.c.b16 %v730, %v728
        %v773 = vpack.c.b16 %v731, %v729
        %v774 = vpack.c.b16 %v734, %v732
        %v775 = vpack.c.b16 %v735, %v733
        %v776 = vpack.c.b16 %v738, %v736
        %v777 = vpack.c.b16 %v739, %v737
        %v778 = vpack.c.b16 %v742, %v740
        %v779 = vpack.c.b16 %v743, %v741
        %v780 = vpack.c.b16 %v746, %v744
        %v781 = vpack.c.b16 %v747, %v745
        %v782 = vpack.c.b16 %v750, %v748
        %v783 = vpack.c.b16 %v751, %v749
        %816 = vmatprep.subr.bf16.mxu0 %v753
        %817 = vmatpush1.bf16.msra.mxu0 %v752
        %818 = vmatprep.subr.bf16.mxu0 %v755
        %819 = vmatpush1.bf16.msra.mxu0 %v754
        %820 = vmatprep.subr.bf16.mxu0 %v757
        %821 = vmatpush1.bf16.msra.mxu0 %v756
        %822 = vmatprep.subr.bf16.mxu0 %v759
        %823 = vmatpush1.bf16.msra.mxu0 %v758
        %824 = vmatprep.subr.bf16.mxu0 %v761
        %825 = vmatpush1.bf16.msra.mxu0 %v760
        %826 = vmatprep.subr.bf16.mxu0 %v763
        %827 = vmatpush1.bf16.msra.mxu0 %v762
        %828 = vmatprep.subr.bf16.mxu0 %v765
        %829 = vmatpush1.bf16.msra.mxu0 %v764
        %830 = vmatprep.subr.bf16.mxu0 %v767
        %831 = vmatpush1.bf16.msra.mxu0 %v766
        %832 = vmatprep.subr.bf16.mxu0 %v769
        %833 = vmatpush1.bf16.msra.mxu0 %v768
        %834 = vmatprep.subr.bf16.mxu0 %v771
        %835 = vmatpush1.bf16.msra.mxu0 %v770
        %836 = vmatprep.subr.bf16.mxu0 %v773
        %837 = vmatpush1.bf16.msra.mxu0 %v772
        %838 = vmatprep.subr.bf16.mxu0 %v775
        %839 = vmatpush1.bf16.msra.mxu0 %v774
        %840 = vmatprep.subr.bf16.mxu0 %v777
        %841 = vmatpush1.bf16.msra.mxu0 %v776
        %842 = vmatprep.subr.bf16.mxu0 %v779
        %843 = vmatpush1.bf16.msra.mxu0 %v778
        %844 = vmatprep.subr.bf16.mxu0 %v781
        %845 = vmatpush1.bf16.msra.mxu0 %v780
        %846 = vmatprep.subr.bf16.mxu0 %v783
        %847 = vmatpush1.bf16.msra.mxu0 %v782
        %848 = vmatprep.mubr.bf16.mxu0 %v653
        %849 = vmatmul.mubr.bf16.gmra.mrb[0].mxu0 %v652
        %v850 = vpop.f32.mrb[0].mxu0
        %v851 = vadd.f32 0.0, %v850
        %v852 = vpop.f32.mrb[0].mxu0
        %v853 = vadd.f32 0.0, %v852
        %v854 = vpop.f32.mrb[0].mxu0
        %v855 = vpop.f32.mrb[0].mxu0
        %856 = vdwg.mxu0
        %v857 = vpack.c.bf16 %v851, %v851
        %v858 = vpack.c.bf16 %v853, %v853
        %v859 = vld [vmem:[%s371] sm:$0xff]
        %v860 = vld [vmem:[%s5] sm:$0xff]
        %v861 = vld [vmem:[%s5 + $0x8] sm:$0xff]
        %v862 = vld [vmem:[%s5 + $0x10] sm:$0xff]
        %v863 = vld [vmem:[%s5 + $0x18] sm:$0xff]
        %v864 = vld [vmem:[%s5 + $0x20] sm:$0xff]
        %v865 = vld [vmem:[%s5 + $0x28] sm:$0xff]
        %v866 = vld [vmem:[%s5 + $0x30] sm:$0xff]
        %v867 = vld [vmem:[%s5 + $0x38] sm:$0xff]
        %v868 = vld [vmem:[%s5 + $0x40] sm:$0xff]
        %v869 = vld [vmem:[%s5 + $0x48] sm:$0xff]
        %v870 = vld [vmem:[%s5 + $0x50] sm:$0xff]
        %v871 = vld [vmem:[%s5 + $0x58] sm:$0xff]
        %v872 = vld [vmem:[%s5 + $0x60] sm:$0xff]
        %v873 = vld [vmem:[%s5 + $0x68] sm:$0xff]
        %v874 = vld [vmem:[%s5 + $0x70] sm:$0xff]
        %v875 = vld [vmem:[%s5 + $0x78] sm:$0xff]
        %v876 = vld [vmem:[%s5 + $0x80] sm:$0xff]
        %v877 = vld [vmem:[%s5 + $0x88] sm:$0xff]
        %v878 = vld [vmem:[%s5 + $0x90] sm:$0xff]
        %v879 = vld [vmem:[%s5 + $0x98] sm:$0xff]
        %v880 = vld [vmem:[%s5 + $0xa0] sm:$0xff]
        %v881 = vld [vmem:[%s5 + $0xa8] sm:$0xff]
        %v882 = vld [vmem:[%s5 + $0xb0] sm:$0xff]
        %v883 = vld [vmem:[%s5 + $0xb8] sm:$0xff]
        %v884 = vld [vmem:[%s5 + $0xc0] sm:$0xff]
        %v885 = vld [vmem:[%s5 + $0xc8] sm:$0xff]
        %v886 = vld [vmem:[%s5 + $0xd0] sm:$0xff]
        %v887 = vld [vmem:[%s5 + $0xd8] sm:$0xff]
        %v888 = vld [vmem:[%s5 + $0xe0] sm:$0xff]
        %v889 = vld [vmem:[%s5 + $0xe8] sm:$0xff]
        %v890 = vld [vmem:[%s5 + $0xf0] sm:$0xff]
        %v891 = vld [vmem:[%s5 + $0xf8] sm:$0xff]
        %v893 = vunpack.c.l.b16 %v859
        %v894 = vunpack.c.h.b16 %v859
        %v895 = vpack.c.b16 %v893, %v893
        %v896 = vpack.c.b16 %v894, %v894
        %v931 = vunpack.c.l.b16 %v860
        %v932 = vunpack.c.h.b16 %v860
        %v933 = vunpack.c.l.b16 %v861
        %v934 = vunpack.c.h.b16 %v861
        %v935 = vunpack.c.l.b16 %v862
        %v936 = vunpack.c.h.b16 %v862
        %v937 = vunpack.c.l.b16 %v863
        %v938 = vunpack.c.h.b16 %v863
        %v939 = vunpack.c.l.b16 %v864
        %v940 = vunpack.c.h.b16 %v864
        %v941 = vunpack.c.l.b16 %v865
        %v942 = vunpack.c.h.b16 %v865
        %v943 = vunpack.c.l.b16 %v866
        %v944 = vunpack.c.h.b16 %v866
        %v945 = vunpack.c.l.b16 %v867
        %v946 = vunpack.c.h.b16 %v867
        %v947 = vunpack.c.l.b16 %v868
        %v948 = vunpack.c.h.b16 %v868
        %v949 = vunpack.c.l.b16 %v869
        %v950 = vunpack.c.h.b16 %v869
        %v951 = vunpack.c.l.b16 %v870
        %v952 = vunpack.c.h.b16 %v870
        %v953 = vunpack.c.l.b16 %v871
        %v954 = vunpack.c.h.b16 %v871
        %v955 = vunpack.c.l.b16 %v872
        %v956 = vunpack.c.h.b16 %v872
        %v957 = vunpack.c.l.b16 %v873
        %v958 = vunpack.c.h.b16 %v873
        %v959 = vunpack.c.l.b16 %v874
        %v960 = vunpack.c.h.b16 %v874
        %v961 = vunpack.c.l.b16 %v875
        %v962 = vunpack.c.h.b16 %v875
        %v963 = vunpack.c.l.b16 %v876
        %v964 = vunpack.c.h.b16 %v876
        %v965 = vunpack.c.l.b16 %v877
        %v966 = vunpack.c.h.b16 %v877
        %v967 = vunpack.c.l.b16 %v878
        %v968 = vunpack.c.h.b16 %v878
        %v969 = vunpack.c.l.b16 %v879
        %v970 = vunpack.c.h.b16 %v879
        %v971 = vunpack.c.l.b16 %v880
        %v972 = vunpack.c.h.b16 %v880
        %v973 = vunpack.c.l.b16 %v881
        %v974 = vunpack.c.h.b16 %v881
        %v975 = vunpack.c.l.b16 %v882
        %v976 = vunpack.c.h.b16 %v882
        %v977 = vunpack.c.l.b16 %v883
        %v978 = vunpack.c.h.b16 %v883
        %v979 = vunpack.c.l.b16 %v884
        %v980 = vunpack.c.h.b16 %v884
        %v981 = vunpack.c.l.b16 %v885
        %v982 = vunpack.c.h.b16 %v885
        %v983 = vunpack.c.l.b16 %v886
        %v984 = vunpack.c.h.b16 %v886
        %v985 = vunpack.c.l.b16 %v887
        %v986 = vunpack.c.h.b16 %v887
        %v987 = vunpack.c.l.b16 %v888
        %v988 = vunpack.c.h.b16 %v888
        %v989 = vunpack.c.l.b16 %v889
        %v990 = vunpack.c.h.b16 %v889
        %v991 = vunpack.c.l.b16 %v890
        %v992 = vunpack.c.h.b16 %v890
        %v993 = vunpack.c.l.b16 %v891
        %v994 = vunpack.c.h.b16 %v891
        %v995 = vpack.c.b16 %v933, %v931
        %v996 = vpack.c.b16 %v934, %v932
        %v997 = vpack.c.b16 %v937, %v935
        %v998 = vpack.c.b16 %v938, %v936
        %v999 = vpack.c.b16 %v941, %v939
        %v1000 = vpack.c.b16 %v942, %v940
        %v1001 = vpack.c.b16 %v945, %v943
        %v1002 = vpack.c.b16 %v946, %v944
        %v1003 = vpack.c.b16 %v949, %v947
        %v1004 = vpack.c.b16 %v950, %v948
        %v1005 = vpack.c.b16 %v953, %v951
        %v1006 = vpack.c.b16 %v954, %v952
        %v1007 = vpack.c.b16 %v957, %v955
        %v1008 = vpack.c.b16 %v958, %v956
        %v1009 = vpack.c.b16 %v961, %v959
        %v1010 = vpack.c.b16 %v962, %v960
        %v1011 = vpack.c.b16 %v965, %v963
        %v1012 = vpack.c.b16 %v966, %v964
        %v1013 = vpack.c.b16 %v969, %v967
        %v1014 = vpack.c.b16 %v970, %v968
        %v1015 = vpack.c.b16 %v973, %v971
        %v1016 = vpack.c.b16 %v974, %v972
        %v1017 = vpack.c.b16 %v977, %v975
        %v1018 = vpack.c.b16 %v978, %v976
        %v1019 = vpack.c.b16 %v981, %v979
        %v1020 = vpack.c.b16 %v982, %v980
        %v1021 = vpack.c.b16 %v985, %v983
        %v1022 = vpack.c.b16 %v986, %v984
        %v1023 = vpack.c.b16 %v989, %v987
        %v1024 = vpack.c.b16 %v990, %v988
        %v1025 = vpack.c.b16 %v993, %v991
        %v1026 = vpack.c.b16 %v994, %v992
        %1059 = vmatprep.subr.bf16.mxu0 %v996
        %1060 = vmatpush1.bf16.msra.mxu0 %v995
        %1061 = vmatprep.subr.bf16.mxu0 %v998
        %1062 = vmatpush1.bf16.msra.mxu0 %v997
        %1063 = vmatprep.subr.bf16.mxu0 %v1000
        %1064 = vmatpush1.bf16.msra.mxu0 %v999
        %1065 = vmatprep.subr.bf16.mxu0 %v1002
        %1066 = vmatpush1.bf16.msra.mxu0 %v1001
        %1067 = vmatprep.subr.bf16.mxu0 %v1004
        %1068 = vmatpush1.bf16.msra.mxu0 %v1003
        %1069 = vmatprep.subr.bf16.mxu0 %v1006
        %1070 = vmatpush1.bf16.msra.mxu0 %v1005
        %1071 = vmatprep.subr.bf16.mxu0 %v1008
        %1072 = vmatpush1.bf16.msra.mxu0 %v1007
        %1073 = vmatprep.subr.bf16.mxu0 %v1010
        %1074 = vmatpush1.bf16.msra.mxu0 %v1009
        %1075 = vmatprep.subr.bf16.mxu0 %v1012
        %1076 = vmatpush1.bf16.msra.mxu0 %v1011
        %1077 = vmatprep.subr.bf16.mxu0 %v1014
        %1078 = vmatpush1.bf16.msra.mxu0 %v1013
        %1079 = vmatprep.subr.bf16.mxu0 %v1016
        %1080 = vmatpush1.bf16.msra.mxu0 %v1015
        %1081 = vmatprep.subr.bf16.mxu0 %v1018
        %1082 = vmatpush1.bf16.msra.mxu0 %v1017
        %1083 = vmatprep.subr.bf16.mxu0 %v1020
        %1084 = vmatpush1.bf16.msra.mxu0 %v1019
        %1085 = vmatprep.subr.bf16.mxu0 %v1022
        %1086 = vmatpush1.bf16.msra.mxu0 %v1021
        %1087 = vmatprep.subr.bf16.mxu0 %v1024
        %1088 = vmatpush1.bf16.msra.mxu0 %v1023
        %1089 = vmatprep.subr.bf16.mxu0 %v1026
        %1090 = vmatpush1.bf16.msra.mxu0 %v1025
        %1091 = vmatprep.mubr.bf16.mxu0 %v896
        %1092 = vmatmul.mubr.bf16.gmra.mrb[0].mxu0 %v895
        %v1093 = vpop.f32.mrb[0].mxu0
        %v1094 = vadd.f32 0.0, %v1093
        %v1095 = vpop.f32.mrb[0].mxu0
        %v1096 = vadd.f32 0.0, %v1095
        %v1097 = vpop.f32.mrb[0].mxu0
        %v1098 = vpop.f32.mrb[0].mxu0
        %1099 = vdwg.mxu0
        %v1100 = vpack.c.bf16 %v1094, %v1094
        %v1101 = vpack.c.bf16 %v1096, %v1096
        %v1102 = vlaneseq
        %v1103 = vand.u32 %v1102, 127
        %v1104 = vadd.s32 %v1103, 128
        %vm1105 = vcmp.ge.s32.totalorder %v1103, 0
        %vm1106 = vcmp.ge.s32.totalorder %v1104, 0
        %vm1107 = vcmp.lt.s32.totalorder %v1103, 32
        %vm1108 = vcmp.lt.s32.totalorder %v1104, 32
        %vm1109 = vmand %vm1105, %vm1107
        %vm1110 = vmand %vm1106, %vm1108
        %v1111 = vsel %vm1109, 1, 0
        %v1112 = vsel %vm1110, 1, 0
        %v1113 = vcvt.s32.f32 %v1111
        %v1114 = vcvt.s32.f32 %v1112
        %v1115 = vpack.c.bf16 %v1113, %v1113
        %v1116 = vpack.c.bf16 %v1114, %v1114
        %v1117 = vmul.bf16 %v614, %v1115
        %v1118 = vmul.bf16 %v615, %v1116
        %1119 = vmatprep.subr.bf16.mxu0 %v858
        %1120 = vmatpush1.bf16.xpose.msra.mxu0 %v857
        %1121 = vmatprep.subr.bf16.mxu0 0
        %1122 = vmatpush1.bf16.xpose.msra.mxu0 0
        %1123 = vmatprep.subr.bf16.mxu0 0
        %1124 = vmatpush1.bf16.xpose.msra.mxu0 0
        %1125 = vmatprep.subr.bf16.mxu0 0
        %1126 = vmatpush1.bf16.xpose.msra.mxu0 0
        %1127 = vmatprep.subr.bf16.mxu0 0
        %1128 = vmatpush1.bf16.xpose.msra.mxu0 0
        %1129 = vmatprep.subr.bf16.mxu0 0
        %1130 = vmatpush1.bf16.xpose.msra.mxu0 0
        %1131 = vmatprep.subr.bf16.mxu0 0
        %1132 = vmatpush1.bf16.xpose.msra.mxu0 0
        %1133 = vmatprep.subr.bf16.mxu0 0
        %1134 = vmatpush1.bf16.xpose.msra.mxu0 0
        %1135 = vmatprep.subr.bf16.mxu0 0
        %1136 = vmatpush1.bf16.xpose.msra.mxu0 0
        %1137 = vmatprep.subr.bf16.mxu0 0
        %1138 = vmatpush1.bf16.xpose.msra.mxu0 0
        %1139 = vmatprep.subr.bf16.mxu0 0
        %1140 = vmatpush1.bf16.xpose.msra.mxu0 0
        %1141 = vmatprep.subr.bf16.mxu0 0
        %1142 = vmatpush1.bf16.xpose.msra.mxu0 0
        %1143 = vmatprep.subr.bf16.mxu0 0
        %1144 = vmatpush1.bf16.xpose.msra.mxu0 0
        %1145 = vmatprep.subr.bf16.mxu0 0
        %1146 = vmatpush1.bf16.xpose.msra.mxu0 0
        %1147 = vmatprep.subr.bf16.mxu0 0
        %1148 = vmatpush1.bf16.xpose.msra.mxu0 0
        %1149 = vmatprep.subr.bf16.mxu0 0
        %1150 = vmatpush1.bf16.xpose.msra.mxu0 0
        %1151 = vmatprep.mubr.bf16.mxu0 %v1118
        %1152 = vmatmul.mubr.bf16.gmra.mrb[0].mxu0 %v1117
        %v1153 = vpop.f32.mrb[0].mxu0
        %v1154 = vadd.f32 0.0, %v1153
        %v1155 = vpop.f32.mrb[0].mxu0
        %v1156 = vpop.f32.mrb[0].mxu0
        %v1157 = vpop.f32.mrb[0].mxu0
        %1158 = vdwg.mxu0
        %vm1159 = vcmask 64512
        %v1160 = vsel %vm1159, %v1154, -inf
        %1161 = vmax.xlane.f32.xlu0 %v1160
        %v1162 = vpop.xlane.xlu0 %1161
        %v1163 = vsub.f32 %v1154, %v1162
        %v1164 = vmul.f32 %v1163, 1.442695
        %v1165 = vpow.pop %v1164
        %v1166 = vsel %vm1159, %v1165, 0.0
        %1167 = vadd.xlane.f32.xlu0 %v1166
        %v1168 = vpop.xlane.xlu0 %1167
        %v1169 = vrcp.pop %v1168
        %v1170 = vmul.f32 %v1165, %v1169
        %v1171 = vpack.c.bf16 %v1170, %v1170
        %v1173 = vsel %vm1159, %v1171, 0
        %vm1175 = vcmask 1043456
        %v1177 = vsel %vm1175, %v1100, 0
        %v1180 = vsel %vm1175, %v1101, 0
        %1182 = vmatprep.subr.bf16.mxu0 %v1180
        %1183 = vmatpush1.bf16.msra.mxu0 %v1177
        %1184 = vmatprep.subr.bf16.mxu0 0
        %1185 = vmatpush1.bf16.msra.mxu0 0
        %1186 = vmatprep.subr.bf16.mxu0 0
        %1187 = vmatpush1.bf16.msra.mxu0 0
        %1188 = vmatprep.subr.bf16.mxu0 0
        %1189 = vmatpush1.bf16.msra.mxu0 0
        %1190 = vmatprep.subr.bf16.mxu0 0
        %1191 = vmatpush1.bf16.msra.mxu0 0
        %1192 = vmatprep.subr.bf16.mxu0 0
        %1193 = vmatpush1.bf16.msra.mxu0 0
        %1194 = vmatprep.subr.bf16.mxu0 0
        %1195 = vmatpush1.bf16.msra.mxu0 0
        %1196 = vmatprep.subr.bf16.mxu0 0
        %1197 = vmatpush1.bf16.msra.mxu0 0
        %1198 = vmatprep.subr.bf16.mxu0 0
        %1199 = vmatpush1.bf16.msra.mxu0 0
        %1200 = vmatprep.subr.bf16.mxu0 0
        %1201 = vmatpush1.bf16.msra.mxu0 0
        %1202 = vmatprep.subr.bf16.mxu0 0
        %1203 = vmatpush1.bf16.msra.mxu0 0
        %1204 = vmatprep.subr.bf16.mxu0 0
        %1205 = vmatpush1.bf16.msra.mxu0 0
        %1206 = vmatprep.subr.bf16.mxu0 0
        %1207 = vmatpush1.bf16.msra.mxu0 0
        %1208 = vmatprep.subr.bf16.mxu0 0
        %1209 = vmatpush1.bf16.msra.mxu0 0
        %1210 = vmatprep.subr.bf16.mxu0 0
        %1211 = vmatpush1.bf16.msra.mxu0 0
        %1212 = vmatprep.subr.bf16.mxu0 0
        %1213 = vmatpush1.bf16.msra.mxu0 0
        %1214 = vmatprep.mubr.bf16.mxu0 0
        %1215 = vmatmul.mubr.bf16.gmra.mrb[0].mxu0 %v1173
        %v1216 = vpop.f32.mrb[0].mxu0
        %v1217 = vadd.f32 0.0, %v1216
        %v1218 = vpop.f32.mrb[0].mxu0
        %v1219 = vadd.f32 0.0, %v1218
        %v1220 = vpop.f32.mrb[0].mxu0
        %v1221 = vpop.f32.mrb[0].mxu0
        %1222 = vdwg.mxu0
        %v1223 = vunpack.c.l.bf16 %v1115
        %v1224 = vunpack.c.l.bf16 %v1116
        %v1225 = vmul.f32 %v1217, %v1223
        %v1226 = vmul.f32 %v1219, %v1224
        %v1227 = vadd.f32 %v1225, 0.0
        %v1228 = vadd.f32 %v1226, 0.0
        %vm1229 = vcmp.ge.s32.totalorder %v1103, 32
        %vm1230 = vcmp.ge.s32.totalorder %v1104, 32
        %vm1231 = vcmp.lt.s32.totalorder %v1103, 64
        %vm1232 = vcmp.lt.s32.totalorder %v1104, 64
        %vm1233 = vmand %vm1229, %vm1231
        %vm1234 = vmand %vm1230, %vm1232
        %v1235 = vsel %vm1233, 1, 0
        %v1236 = vsel %vm1234, 1, 0
        %v1237 = vcvt.s32.f32 %v1235
        %v1238 = vcvt.s32.f32 %v1236
        %v1239 = vpack.c.bf16 %v1237, %v1237
        %v1240 = vpack.c.bf16 %v1238, %v1238
        %v1241 = vmul.bf16 %v614, %v1239
        %v1242 = vmul.bf16 %v615, %v1240
        %1243 = vmatprep.subr.bf16.mxu0 %v858
        %1244 = vmatpush1.bf16.xpose.msra.mxu0 %v857
        %1245 = vmatprep.subr.bf16.mxu0 0
        %1246 = vmatpush1.bf16.xpose.msra.mxu0 0
        %1247 = vmatprep.subr.bf16.mxu0 0
        %1248 = vmatpush1.bf16.xpose.msra.mxu0 0
        %1249 = vmatprep.subr.bf16.mxu0 0
        %1250 = vmatpush1.bf16.xpose.msra.mxu0 0
        %1251 = vmatprep.subr.bf16.mxu0 0
        %1252 = vmatpush1.bf16.xpose.msra.mxu0 0
        %1253 = vmatprep.subr.bf16.mxu0 0
        %1254 = vmatpush1.bf16.xpose.msra.mxu0 0
        %1255 = vmatprep.subr.bf16.mxu0 0
        %1256 = vmatpush1.bf16.xpose.msra.mxu0 0
        %1257 = vmatprep.subr.bf16.mxu0 0
        %1258 = vmatpush1.bf16.xpose.msra.mxu0 0
        %1259 = vmatprep.subr.bf16.mxu0 0
        %1260 = vmatpush1.bf16.xpose.msra.mxu0 0
        %1261 = vmatprep.subr.bf16.mxu0 0
        %1262 = vmatpush1.bf16.xpose.msra.mxu0 0
        %1263 = vmatprep.subr.bf16.mxu0 0
        %1264 = vmatpush1.bf16.xpose.msra.mxu0 0
        %1265 = vmatprep.subr.bf16.mxu0 0
        %1266 = vmatpush1.bf16.xpose.msra.mxu0 0
        %1267 = vmatprep.subr.bf16.mxu0 0
        %1268 = vmatpush1.bf16.xpose.msra.mxu0 0
        %1269 = vmatprep.subr.bf16.mxu0 0
        %1270 = vmatpush1.bf16.xpose.msra.mxu0 0
        %1271 = vmatprep.subr.bf16.mxu0 0
        %1272 = vmatpush1.bf16.xpose.msra.mxu0 0
        %1273 = vmatprep.subr.bf16.mxu0 0
        %1274 = vmatpush1.bf16.xpose.msra.mxu0 0
        %1275 = vmatprep.mubr.bf16.mxu0 %v1242
        %1276 = vmatmul.mubr.bf16.gmra.mrb[0].mxu0 %v1241
        %v1277 = vpop.f32.mrb[0].mxu0
        %v1278 = vadd.f32 0.0, %v1277
        %v1279 = vpop.f32.mrb[0].mxu0
        %v1280 = vpop.f32.mrb[0].mxu0
        %v1281 = vpop.f32.mrb[0].mxu0
        %1282 = vdwg.mxu0
        %v1283 = vsel %vm1159, %v1278, -inf
        %1284 = vmax.xlane.f32.xlu0 %v1283
        %v1285 = vpop.xlane.xlu0 %1284
        %v1286 = vsub.f32 %v1278, %v1285
        %v1287 = vmul.f32 %v1286, 1.442695
        %v1288 = vpow.pop %v1287
        %v1289 = vsel %vm1159, %v1288, 0.0
        %1290 = vadd.xlane.f32.xlu0 %v1289
        %v1291 = vpop.xlane.xlu0 %1290
        %v1292 = vrcp.pop %v1291
        %v1293 = vmul.f32 %v1288, %v1292
        %v1294 = vpack.c.bf16 %v1293, %v1293
        %v1296 = vsel %vm1159, %v1294, 0
        %1298 = vmatprep.subr.bf16.mxu0 %v1180
        %1299 = vmatpush1.bf16.msra.mxu0 %v1177
        %1300 = vmatprep.subr.bf16.mxu0 0
        %1301 = vmatpush1.bf16.msra.mxu0 0
        %1302 = vmatprep.subr.bf16.mxu0 0
        %1303 = vmatpush1.bf16.msra.mxu0 0
        %1304 = vmatprep.subr.bf16.mxu0 0
        %1305 = vmatpush1.bf16.msra.mxu0 0
        %1306 = vmatprep.subr.bf16.mxu0 0
        %1307 = vmatpush1.bf16.msra.mxu0 0
        %1308 = vmatprep.subr.bf16.mxu0 0
        %1309 = vmatpush1.bf16.msra.mxu0 0
        %1310 = vmatprep.subr.bf16.mxu0 0
        %1311 = vmatpush1.bf16.msra.mxu0 0
        %1312 = vmatprep.subr.bf16.mxu0 0
        %1313 = vmatpush1.bf16.msra.mxu0 0
        %1314 = vmatprep.subr.bf16.mxu0 0
        %1315 = vmatpush1.bf16.msra.mxu0 0
        %1316 = vmatprep.subr.bf16.mxu0 0
        %1317 = vmatpush1.bf16.msra.mxu0 0
        %1318 = vmatprep.subr.bf16.mxu0 0
        %1319 = vmatpush1.bf16.msra.mxu0 0
        %1320 = vmatprep.subr.bf16.mxu0 0
        %1321 = vmatpush1.bf16.msra.mxu0 0
        %1322 = vmatprep.subr.bf16.mxu0 0
        %1323 = vmatpush1.bf16.msra.mxu0 0
        %1324 = vmatprep.subr.bf16.mxu0 0
        %1325 = vmatpush1.bf16.msra.mxu0 0
        %1326 = vmatprep.subr.bf16.mxu0 0
        %1327 = vmatpush1.bf16.msra.mxu0 0
        %1328 = vmatprep.subr.bf16.mxu0 0
        %1329 = vmatpush1.bf16.msra.mxu0 0
        %1330 = vmatprep.mubr.bf16.mxu0 0
        %1331 = vmatmul.mubr.bf16.gmra.mrb[0].mxu0 %v1296
        %v1332 = vpop.f32.mrb[0].mxu0
        %v1333 = vadd.f32 0.0, %v1332
        %v1334 = vpop.f32.mrb[0].mxu0
        %v1335 = vadd.f32 0.0, %v1334
        %v1336 = vpop.f32.mrb[0].mxu0
        %v1337 = vpop.f32.mrb[0].mxu0
        %1338 = vdwg.mxu0
        %v1339 = vunpack.c.l.bf16 %v1239
        %v1340 = vunpack.c.l.bf16 %v1240
        %v1341 = vmul.f32 %v1333, %v1339
        %v1342 = vmul.f32 %v1335, %v1340
        %v1343 = vadd.f32 %v1227, %v1341
        %v1344 = vadd.f32 %v1228, %v1342
        %vm1345 = vcmp.ge.s32.totalorder %v1103, 64
        %vm1346 = vcmp.ge.s32.totalorder %v1104, 64
        %vm1347 = vcmp.lt.s32.totalorder %v1103, 96
        %vm1348 = vcmp.lt.s32.totalorder %v1104, 96
        %vm1349 = vmand %vm1345, %vm1347
        %vm1350 = vmand %vm1346, %vm1348
        %v1351 = vsel %vm1349, 1, 0
        %v1352 = vsel %vm1350, 1, 0
        %v1353 = vcvt.s32.f32 %v1351
        %v1354 = vcvt.s32.f32 %v1352
        %v1355 = vpack.c.bf16 %v1353, %v1353
        %v1356 = vpack.c.bf16 %v1354, %v1354
        %v1357 = vmul.bf16 %v614, %v1355
        %v1358 = vmul.bf16 %v615, %v1356
        %1359 = vmatprep.subr.bf16.mxu0 %v858
        %1360 = vmatpush1.bf16.xpose.msra.mxu0 %v857
        %1361 = vmatprep.subr.bf16.mxu0 0
        %1362 = vmatpush1.bf16.xpose.msra.mxu0 0
        %1363 = vmatprep.subr.bf16.mxu0 0
        %1364 = vmatpush1.bf16.xpose.msra.mxu0 0
        %1365 = vmatprep.subr.bf16.mxu0 0
        %1366 = vmatpush1.bf16.xpose.msra.mxu0 0
        %1367 = vmatprep.subr.bf16.mxu0 0
        %1368 = vmatpush1.bf16.xpose.msra.mxu0 0
        %1369 = vmatprep.subr.bf16.mxu0 0
        %1370 = vmatpush1.bf16.xpose.msra.mxu0 0
        %1371 = vmatprep.subr.bf16.mxu0 0
        %1372 = vmatpush1.bf16.xpose.msra.mxu0 0
        %1373 = vmatprep.subr.bf16.mxu0 0
        %1374 = vmatpush1.bf16.xpose.msra.mxu0 0
        %1375 = vmatprep.subr.bf16.mxu0 0
        %1376 = vmatpush1.bf16.xpose.msra.mxu0 0
        %1377 = vmatprep.subr.bf16.mxu0 0
        %1378 = vmatpush1.bf16.xpose.msra.mxu0 0
        %1379 = vmatprep.subr.bf16.mxu0 0
        %1380 = vmatpush1.bf16.xpose.msra.mxu0 0
        %1381 = vmatprep.subr.bf16.mxu0 0
        %1382 = vmatpush1.bf16.xpose.msra.mxu0 0
        %1383 = vmatprep.subr.bf16.mxu0 0
        %1384 = vmatpush1.bf16.xpose.msra.mxu0 0
        %1385 = vmatprep.subr.bf16.mxu0 0
        %1386 = vmatpush1.bf16.xpose.msra.mxu0 0
        %1387 = vmatprep.subr.bf16.mxu0 0
        %1388 = vmatpush1.bf16.xpose.msra.mxu0 0
        %1389 = vmatprep.subr.bf16.mxu0 0
        %1390 = vmatpush1.bf16.xpose.msra.mxu0 0
        %1391 = vmatprep.mubr.bf16.mxu0 %v1358
        %1392 = vmatmul.mubr.bf16.gmra.mrb[0].mxu0 %v1357
        %v1393 = vpop.f32.mrb[0].mxu0
        %v1394 = vadd.f32 0.0, %v1393
        %v1395 = vpop.f32.mrb[0].mxu0
        %v1396 = vpop.f32.mrb[0].mxu0
        %v1397 = vpop.f32.mrb[0].mxu0
        %1398 = vdwg.mxu0
        %v1399 = vsel %vm1159, %v1394, -inf
        %1400 = vmax.xlane.f32.xlu0 %v1399
        %v1401 = vpop.xlane.xlu0 %1400
        %v1402 = vsub.f32 %v1394, %v1401
        %v1403 = vmul.f32 %v1402, 1.442695
        %v1404 = vpow.pop %v1403
        %v1405 = vsel %vm1159, %v1404, 0.0
        %1406 = vadd.xlane.f32.xlu0 %v1405
        %v1407 = vpop.xlane.xlu0 %1406
        %v1408 = vrcp.pop %v1407
        %v1409 = vmul.f32 %v1404, %v1408
        %v1410 = vpack.c.bf16 %v1409, %v1409
        %v1412 = vsel %vm1159, %v1410, 0
        %1414 = vmatprep.subr.bf16.mxu0 %v1180
        %1415 = vmatpush1.bf16.msra.mxu0 %v1177
        %1416 = vmatprep.subr.bf16.mxu0 0
        %1417 = vmatpush1.bf16.msra.mxu0 0
        %1418 = vmatprep.subr.bf16.mxu0 0
        %1419 = vmatpush1.bf16.msra.mxu0 0
        %1420 = vmatprep.subr.bf16.mxu0 0
        %1421 = vmatpush1.bf16.msra.mxu0 0
        %1422 = vmatprep.subr.bf16.mxu0 0
        %1423 = vmatpush1.bf16.msra.mxu0 0
        %1424 = vmatprep.subr.bf16.mxu0 0
        %1425 = vmatpush1.bf16.msra.mxu0 0
        %1426 = vmatprep.subr.bf16.mxu0 0
        %1427 = vmatpush1.bf16.msra.mxu0 0
        %1428 = vmatprep.subr.bf16.mxu0 0
        %1429 = vmatpush1.bf16.msra.mxu0 0
        %1430 = vmatprep.subr.bf16.mxu0 0
        %1431 = vmatpush1.bf16.msra.mxu0 0
        %1432 = vmatprep.subr.bf16.mxu0 0
        %1433 = vmatpush1.bf16.msra.mxu0 0
        %1434 = vmatprep.subr.bf16.mxu0 0
        %1435 = vmatpush1.bf16.msra.mxu0 0
        %1436 = vmatprep.subr.bf16.mxu0 0
        %1437 = vmatpush1.bf16.msra.mxu0 0
        %1438 = vmatprep.subr.bf16.mxu0 0
        %1439 = vmatpush1.bf16.msra.mxu0 0
        %1440 = vmatprep.subr.bf16.mxu0 0
        %1441 = vmatpush1.bf16.msra.mxu0 0
        %1442 = vmatprep.subr.bf16.mxu0 0
        %1443 = vmatpush1.bf16.msra.mxu0 0
        %1444 = vmatprep.subr.bf16.mxu0 0
        %1445 = vmatpush1.bf16.msra.mxu0 0
        %1446 = vmatprep.mubr.bf16.mxu0 0
        %1447 = vmatmul.mubr.bf16.gmra.mrb[0].mxu0 %v1412
        %v1448 = vpop.f32.mrb[0].mxu0
        %v1449 = vadd.f32 0.0, %v1448
        %v1450 = vpop.f32.mrb[0].mxu0
        %v1451 = vadd.f32 0.0, %v1450
        %v1452 = vpop.f32.mrb[0].mxu0
        %v1453 = vpop.f32.mrb[0].mxu0
        %1454 = vdwg.mxu0
        %v1455 = vunpack.c.l.bf16 %v1355
        %v1456 = vunpack.c.l.bf16 %v1356
        %v1457 = vmul.f32 %v1449, %v1455
        %v1458 = vmul.f32 %v1451, %v1456
        %v1459 = vadd.f32 %v1343, %v1457
        %v1460 = vadd.f32 %v1344, %v1458
        %vm1461 = vcmp.ge.s32.totalorder %v1103, 96
        %vm1462 = vcmp.ge.s32.totalorder %v1104, 96
        %vm1463 = vcmp.lt.s32.totalorder %v1103, 128
        %vm1464 = vcmp.lt.s32.totalorder %v1104, 128
        %vm1465 = vmand %vm1461, %vm1463
        %vm1466 = vmand %vm1462, %vm1464
        %v1467 = vsel %vm1465, 1, 0
        %v1468 = vsel %vm1466, 1, 0
        %v1469 = vcvt.s32.f32 %v1467
        %v1470 = vcvt.s32.f32 %v1468
        %v1471 = vpack.c.bf16 %v1469, %v1469
        %v1472 = vpack.c.bf16 %v1470, %v1470
        %v1473 = vmul.bf16 %v614, %v1471
        %v1474 = vmul.bf16 %v615, %v1472
        %1475 = vmatprep.subr.bf16.mxu0 %v858
        %1476 = vmatpush1.bf16.xpose.msra.mxu0 %v857
        %1477 = vmatprep.subr.bf16.mxu0 0
        %1478 = vmatpush1.bf16.xpose.msra.mxu0 0
        %1479 = vmatprep.subr.bf16.mxu0 0
        %1480 = vmatpush1.bf16.xpose.msra.mxu0 0
        %1481 = vmatprep.subr.bf16.mxu0 0
        %1482 = vmatpush1.bf16.xpose.msra.mxu0 0
        %1483 = vmatprep.subr.bf16.mxu0 0
        %1484 = vmatpush1.bf16.xpose.msra.mxu0 0
        %1485 = vmatprep.subr.bf16.mxu0 0
        %1486 = vmatpush1.bf16.xpose.msra.mxu0 0
        %1487 = vmatprep.subr.bf16.mxu0 0
        %1488 = vmatpush1.bf16.xpose.msra.mxu0 0
        %1489 = vmatprep.subr.bf16.mxu0 0
        %1490 = vmatpush1.bf16.xpose.msra.mxu0 0
        %1491 = vmatprep.subr.bf16.mxu0 0
        %1492 = vmatpush1.bf16.xpose.msra.mxu0 0
        %1493 = vmatprep.subr.bf16.mxu0 0
        %1494 = vmatpush1.bf16.xpose.msra.mxu0 0
        %1495 = vmatprep.subr.bf16.mxu0 0
        %1496 = vmatpush1.bf16.xpose.msra.mxu0 0
        %1497 = vmatprep.subr.bf16.mxu0 0
        %1498 = vmatpush1.bf16.xpose.msra.mxu0 0
        %1499 = vmatprep.subr.bf16.mxu0 0
        %1500 = vmatpush1.bf16.xpose.msra.mxu0 0
        %1501 = vmatprep.subr.bf16.mxu0 0
        %1502 = vmatpush1.bf16.xpose.msra.mxu0 0
        %1503 = vmatprep.subr.bf16.mxu0 0
        %1504 = vmatpush1.bf16.xpose.msra.mxu0 0
        %1505 = vmatprep.subr.bf16.mxu0 0
        %1506 = vmatpush1.bf16.xpose.msra.mxu0 0
        %1507 = vmatprep.mubr.bf16.mxu0 %v1474
        %1508 = vmatmul.mubr.bf16.gmra.mrb[0].mxu0 %v1473
        %v1509 = vpop.f32.mrb[0].mxu0
        %v1510 = vadd.f32 0.0, %v1509
        %v1511 = vpop.f32.mrb[0].mxu0
        %v1512 = vpop.f32.mrb[0].mxu0
        %v1513 = vpop.f32.mrb[0].mxu0
        %1514 = vdwg.mxu0
        %v1515 = vsel %vm1159, %v1510, -inf
        %1516 = vmax.xlane.f32.xlu0 %v1515
        %v1517 = vpop.xlane.xlu0 %1516
        %v1518 = vsub.f32 %v1510, %v1517
        %v1519 = vmul.f32 %v1518, 1.442695
        %v1520 = vpow.pop %v1519
        %v1521 = vsel %vm1159, %v1520, 0.0
        %1522 = vadd.xlane.f32.xlu0 %v1521
        %v1523 = vpop.xlane.xlu0 %1522
        %v1524 = vrcp.pop %v1523
        %v1525 = vmul.f32 %v1520, %v1524
        %v1526 = vpack.c.bf16 %v1525, %v1525
        %v1528 = vsel %vm1159, %v1526, 0
        %1530 = vmatprep.subr.bf16.mxu0 %v1180
        %1531 = vmatpush1.bf16.msra.mxu0 %v1177
        %1532 = vmatprep.subr.bf16.mxu0 0
        %1533 = vmatpush1.bf16.msra.mxu0 0
        %1534 = vmatprep.subr.bf16.mxu0 0
        %1535 = vmatpush1.bf16.msra.mxu0 0
        %1536 = vmatprep.subr.bf16.mxu0 0
        %1537 = vmatpush1.bf16.msra.mxu0 0
        %1538 = vmatprep.subr.bf16.mxu0 0
        %1539 = vmatpush1.bf16.msra.mxu0 0
        %1540 = vmatprep.subr.bf16.mxu0 0
        %1541 = vmatpush1.bf16.msra.mxu0 0
        %1542 = vmatprep.subr.bf16.mxu0 0
        %1543 = vmatpush1.bf16.msra.mxu0 0
        %1544 = vmatprep.subr.bf16.mxu0 0
        %1545 = vmatpush1.bf16.msra.mxu0 0
        %1546 = vmatprep.subr.bf16.mxu0 0
        %1547 = vmatpush1.bf16.msra.mxu0 0
        %1548 = vmatprep.subr.bf16.mxu0 0
        %1549 = vmatpush1.bf16.msra.mxu0 0
        %1550 = vmatprep.subr.bf16.mxu0 0
        %1551 = vmatpush1.bf16.msra.mxu0 0
        %1552 = vmatprep.subr.bf16.mxu0 0
        %1553 = vmatpush1.bf16.msra.mxu0 0
        %1554 = vmatprep.subr.bf16.mxu0 0
        %1555 = vmatpush1.bf16.msra.mxu0 0
        %1556 = vmatprep.subr.bf16.mxu0 0
        %1557 = vmatpush1.bf16.msra.mxu0 0
        %1558 = vmatprep.subr.bf16.mxu0 0
        %1559 = vmatpush1.bf16.msra.mxu0 0
        %1560 = vmatprep.subr.bf16.mxu0 0
        %1561 = vmatpush1.bf16.msra.mxu0 0
        %1562 = vmatprep.mubr.bf16.mxu0 0
        %1563 = vmatmul.mubr.bf16.gmra.mrb[0].mxu0 %v1528
        %v1564 = vpop.f32.mrb[0].mxu0
        %v1565 = vadd.f32 0.0, %v1564
        %v1566 = vpop.f32.mrb[0].mxu0
        %v1567 = vadd.f32 0.0, %v1566
        %v1568 = vpop.f32.mrb[0].mxu0
        %v1569 = vpop.f32.mrb[0].mxu0
        %1570 = vdwg.mxu0
        %v1571 = vunpack.c.l.bf16 %v1471
        %v1572 = vunpack.c.l.bf16 %v1472
        %v1573 = vmul.f32 %v1565, %v1571
        %v1574 = vmul.f32 %v1567, %v1572
        %v1575 = vadd.f32 %v1459, %v1573
        %v1576 = vadd.f32 %v1460, %v1574
        %vm1577 = vcmp.ge.s32.totalorder %v1103, 128
        %vm1578 = vcmp.ge.s32.totalorder %v1104, 128
        %vm1579 = vcmp.lt.s32.totalorder %v1103, 160
        %vm1580 = vcmp.lt.s32.totalorder %v1104, 160
        %vm1581 = vmand %vm1577, %vm1579
        %vm1582 = vmand %vm1578, %vm1580
        %v1583 = vsel %vm1581, 1, 0
        %v1584 = vsel %vm1582, 1, 0
        %v1585 = vcvt.s32.f32 %v1583
        %v1586 = vcvt.s32.f32 %v1584
        %v1587 = vpack.c.bf16 %v1585, %v1585
        %v1588 = vpack.c.bf16 %v1586, %v1586
        %v1589 = vmul.bf16 %v614, %v1587
        %v1590 = vmul.bf16 %v615, %v1588
        %1591 = vmatprep.subr.bf16.mxu0 %v858
        %1592 = vmatpush1.bf16.xpose.msra.mxu0 %v857
        %1593 = vmatprep.subr.bf16.mxu0 0
        %1594 = vmatpush1.bf16.xpose.msra.mxu0 0
        %1595 = vmatprep.subr.bf16.mxu0 0
        %1596 = vmatpush1.bf16.xpose.msra.mxu0 0
        %1597 = vmatprep.subr.bf16.mxu0 0
        %1598 = vmatpush1.bf16.xpose.msra.mxu0 0
        %1599 = vmatprep.subr.bf16.mxu0 0
        %1600 = vmatpush1.bf16.xpose.msra.mxu0 0
        %1601 = vmatprep.subr.bf16.mxu0 0
        %1602 = vmatpush1.bf16.xpose.msra.mxu0 0
        %1603 = vmatprep.subr.bf16.mxu0 0
        %1604 = vmatpush1.bf16.xpose.msra.mxu0 0
        %1605 = vmatprep.subr.bf16.mxu0 0
        %1606 = vmatpush1.bf16.xpose.msra.mxu0 0
        %1607 = vmatprep.subr.bf16.mxu0 0
        %1608 = vmatpush1.bf16.xpose.msra.mxu0 0
        %1609 = vmatprep.subr.bf16.mxu0 0
        %1610 = vmatpush1.bf16.xpose.msra.mxu0 0
        %1611 = vmatprep.subr.bf16.mxu0 0
        %1612 = vmatpush1.bf16.xpose.msra.mxu0 0
        %1613 = vmatprep.subr.bf16.mxu0 0
        %1614 = vmatpush1.bf16.xpose.msra.mxu0 0
        %1615 = vmatprep.subr.bf16.mxu0 0
        %1616 = vmatpush1.bf16.xpose.msra.mxu0 0
        %1617 = vmatprep.subr.bf16.mxu0 0
        %1618 = vmatpush1.bf16.xpose.msra.mxu0 0
        %1619 = vmatprep.subr.bf16.mxu0 0
        %1620 = vmatpush1.bf16.xpose.msra.mxu0 0
        %1621 = vmatprep.subr.bf16.mxu0 0
        %1622 = vmatpush1.bf16.xpose.msra.mxu0 0
        %1623 = vmatprep.mubr.bf16.mxu0 %v1590
        %1624 = vmatmul.mubr.bf16.gmra.mrb[0].mxu0 %v1589
        %v1625 = vpop.f32.mrb[0].mxu0
        %v1626 = vadd.f32 0.0, %v1625
        %v1627 = vpop.f32.mrb[0].mxu0
        %v1628 = vpop.f32.mrb[0].mxu0
        %v1629 = vpop.f32.mrb[0].mxu0
        %1630 = vdwg.mxu0
        %v1631 = vsel %vm1159, %v1626, -inf
        %1632 = vmax.xlane.f32.xlu0 %v1631
        %v1633 = vpop.xlane.xlu0 %1632
        %v1634 = vsub.f32 %v1626, %v1633
        %v1635 = vmul.f32 %v1634, 1.442695
        %v1636 = vpow.pop %v1635
        %v1637 = vsel %vm1159, %v1636, 0.0
        %1638 = vadd.xlane.f32.xlu0 %v1637
        %v1639 = vpop.xlane.xlu0 %1638
        %v1640 = vrcp.pop %v1639
        %v1641 = vmul.f32 %v1636, %v1640
        %v1642 = vpack.c.bf16 %v1641, %v1641
        %v1644 = vsel %vm1159, %v1642, 0
        %1646 = vmatprep.subr.bf16.mxu0 %v1180
        %1647 = vmatpush1.bf16.msra.mxu0 %v1177
        %1648 = vmatprep.subr.bf16.mxu0 0
        %1649 = vmatpush1.bf16.msra.mxu0 0
        %1650 = vmatprep.subr.bf16.mxu0 0
        %1651 = vmatpush1.bf16.msra.mxu0 0
        %1652 = vmatprep.subr.bf16.mxu0 0
        %1653 = vmatpush1.bf16.msra.mxu0 0
        %1654 = vmatprep.subr.bf16.mxu0 0
        %1655 = vmatpush1.bf16.msra.mxu0 0
        %1656 = vmatprep.subr.bf16.mxu0 0
        %1657 = vmatpush1.bf16.msra.mxu0 0
        %1658 = vmatprep.subr.bf16.mxu0 0
        %1659 = vmatpush1.bf16.msra.mxu0 0
        %1660 = vmatprep.subr.bf16.mxu0 0
        %1661 = vmatpush1.bf16.msra.mxu0 0
        %1662 = vmatprep.subr.bf16.mxu0 0
        %1663 = vmatpush1.bf16.msra.mxu0 0
        %1664 = vmatprep.subr.bf16.mxu0 0
        %1665 = vmatpush1.bf16.msra.mxu0 0
        %1666 = vmatprep.subr.bf16.mxu0 0
        %1667 = vmatpush1.bf16.msra.mxu0 0
        %1668 = vmatprep.subr.bf16.mxu0 0
        %1669 = vmatpush1.bf16.msra.mxu0 0
        %1670 = vmatprep.subr.bf16.mxu0 0
        %1671 = vmatpush1.bf16.msra.mxu0 0
        %1672 = vmatprep.subr.bf16.mxu0 0
        %1673 = vmatpush1.bf16.msra.mxu0 0
        %1674 = vmatprep.subr.bf16.mxu0 0
        %1675 = vmatpush1.bf16.msra.mxu0 0
        %1676 = vmatprep.subr.bf16.mxu0 0
        %1677 = vmatpush1.bf16.msra.mxu0 0
        %1678 = vmatprep.mubr.bf16.mxu0 0
        %1679 = vmatmul.mubr.bf16.gmra.mrb[0].mxu0 %v1644
        %v1680 = vpop.f32.mrb[0].mxu0
        %v1681 = vadd.f32 0.0, %v1680
        %v1682 = vpop.f32.mrb[0].mxu0
        %v1683 = vadd.f32 0.0, %v1682
        %v1684 = vpop.f32.mrb[0].mxu0
        %v1685 = vpop.f32.mrb[0].mxu0
        %1686 = vdwg.mxu0
        %v1687 = vunpack.c.l.bf16 %v1587
        %v1688 = vunpack.c.l.bf16 %v1588
        %v1689 = vmul.f32 %v1681, %v1687
        %v1690 = vmul.f32 %v1683, %v1688
        %v1691 = vadd.f32 %v1575, %v1689
        %v1692 = vadd.f32 %v1576, %v1690
        %vm1693 = vcmp.ge.s32.totalorder %v1103, 160
        %vm1694 = vcmp.ge.s32.totalorder %v1104, 160
        %vm1695 = vcmp.lt.s32.totalorder %v1103, 192
        %vm1696 = vcmp.lt.s32.totalorder %v1104, 192
        %vm1697 = vmand %vm1693, %vm1695
        %vm1698 = vmand %vm1694, %vm1696
        %v1699 = vsel %vm1697, 1, 0
        %v1700 = vsel %vm1698, 1, 0
        %v1701 = vcvt.s32.f32 %v1699
        %v1702 = vcvt.s32.f32 %v1700
        %v1703 = vpack.c.bf16 %v1701, %v1701
        %v1704 = vpack.c.bf16 %v1702, %v1702
        %v1705 = vmul.bf16 %v614, %v1703
        %v1706 = vmul.bf16 %v615, %v1704
        %1707 = vmatprep.subr.bf16.mxu0 %v858
        %1708 = vmatpush1.bf16.xpose.msra.mxu0 %v857
        %1709 = vmatprep.subr.bf16.mxu0 0
        %1710 = vmatpush1.bf16.xpose.msra.mxu0 0
        %1711 = vmatprep.subr.bf16.mxu0 0
        %1712 = vmatpush1.bf16.xpose.msra.mxu0 0
        %1713 = vmatprep.subr.bf16.mxu0 0
        %1714 = vmatpush1.bf16.xpose.msra.mxu0 0
        %1715 = vmatprep.subr.bf16.mxu0 0
        %1716 = vmatpush1.bf16.xpose.msra.mxu0 0
        %1717 = vmatprep.subr.bf16.mxu0 0
        %1718 = vmatpush1.bf16.xpose.msra.mxu0 0
        %1719 = vmatprep.subr.bf16.mxu0 0
        %1720 = vmatpush1.bf16.xpose.msra.mxu0 0
        %1721 = vmatprep.subr.bf16.mxu0 0
        %1722 = vmatpush1.bf16.xpose.msra.mxu0 0
        %1723 = vmatprep.subr.bf16.mxu0 0
        %1724 = vmatpush1.bf16.xpose.msra.mxu0 0
        %1725 = vmatprep.subr.bf16.mxu0 0
        %1726 = vmatpush1.bf16.xpose.msra.mxu0 0
        %1727 = vmatprep.subr.bf16.mxu0 0
        %1728 = vmatpush1.bf16.xpose.msra.mxu0 0
        %1729 = vmatprep.subr.bf16.mxu0 0
        %1730 = vmatpush1.bf16.xpose.msra.mxu0 0
        %1731 = vmatprep.subr.bf16.mxu0 0
        %1732 = vmatpush1.bf16.xpose.msra.mxu0 0
        %1733 = vmatprep.subr.bf16.mxu0 0
        %1734 = vmatpush1.bf16.xpose.msra.mxu0 0
        %1735 = vmatprep.subr.bf16.mxu0 0
        %1736 = vmatpush1.bf16.xpose.msra.mxu0 0
        %1737 = vmatprep.subr.bf16.mxu0 0
        %1738 = vmatpush1.bf16.xpose.msra.mxu0 0
        %1739 = vmatprep.mubr.bf16.mxu0 %v1706
        %1740 = vmatmul.mubr.bf16.gmra.mrb[0].mxu0 %v1705
        %v1741 = vpop.f32.mrb[0].mxu0
        %v1742 = vadd.f32 0.0, %v1741
        %v1743 = vpop.f32.mrb[0].mxu0
        %v1744 = vpop.f32.mrb[0].mxu0
        %v1745 = vpop.f32.mrb[0].mxu0
        %1746 = vdwg.mxu0
        %v1747 = vsel %vm1159, %v1742, -inf
        %1748 = vmax.xlane.f32.xlu0 %v1747
        %v1749 = vpop.xlane.xlu0 %1748
        %v1750 = vsub.f32 %v1742, %v1749
        %v1751 = vmul.f32 %v1750, 1.442695
        %v1752 = vpow.pop %v1751
        %v1753 = vsel %vm1159, %v1752, 0.0
        %1754 = vadd.xlane.f32.xlu0 %v1753
        %v1755 = vpop.xlane.xlu0 %1754
        %v1756 = vrcp.pop %v1755
        %v1757 = vmul.f32 %v1752, %v1756
        %v1758 = vpack.c.bf16 %v1757, %v1757
        %v1760 = vsel %vm1159, %v1758, 0
        %1762 = vmatprep.subr.bf16.mxu0 %v1180
        %1763 = vmatpush1.bf16.msra.mxu0 %v1177
        %1764 = vmatprep.subr.bf16.mxu0 0
        %1765 = vmatpush1.bf16.msra.mxu0 0
        %1766 = vmatprep.subr.bf16.mxu0 0
        %1767 = vmatpush1.bf16.msra.mxu0 0
        %1768 = vmatprep.subr.bf16.mxu0 0
        %1769 = vmatpush1.bf16.msra.mxu0 0
        %1770 = vmatprep.subr.bf16.mxu0 0
        %1771 = vmatpush1.bf16.msra.mxu0 0
        %1772 = vmatprep.subr.bf16.mxu0 0
        %1773 = vmatpush1.bf16.msra.mxu0 0
        %1774 = vmatprep.subr.bf16.mxu0 0
        %1775 = vmatpush1.bf16.msra.mxu0 0
        %1776 = vmatprep.subr.bf16.mxu0 0
        %1777 = vmatpush1.bf16.msra.mxu0 0
        %1778 = vmatprep.subr.bf16.mxu0 0
        %1779 = vmatpush1.bf16.msra.mxu0 0
        %1780 = vmatprep.subr.bf16.mxu0 0
        %1781 = vmatpush1.bf16.msra.mxu0 0
        %1782 = vmatprep.subr.bf16.mxu0 0
        %1783 = vmatpush1.bf16.msra.mxu0 0
        %1784 = vmatprep.subr.bf16.mxu0 0
        %1785 = vmatpush1.bf16.msra.mxu0 0
        %1786 = vmatprep.subr.bf16.mxu0 0
        %1787 = vmatpush1.bf16.msra.mxu0 0
        %1788 = vmatprep.subr.bf16.mxu0 0
        %1789 = vmatpush1.bf16.msra.mxu0 0
        %1790 = vmatprep.subr.bf16.mxu0 0
        %1791 = vmatpush1.bf16.msra.mxu0 0
        %1792 = vmatprep.subr.bf16.mxu0 0
        %1793 = vmatpush1.bf16.msra.mxu0 0
        %1794 = vmatprep.mubr.bf16.mxu0 0
        %1795 = vmatmul.mubr.bf16.gmra.mrb[0].mxu0 %v1760
        %v1796 = vpop.f32.mrb[0].mxu0
        %v1797 = vadd.f32 0.0, %v1796
        %v1798 = vpop.f32.mrb[0].mxu0
        %v1799 = vadd.f32 0.0, %v1798
        %v1800 = vpop.f32.mrb[0].mxu0
        %v1801 = vpop.f32.mrb[0].mxu0
        %1802 = vdwg.mxu0
        %v1803 = vunpack.c.l.bf16 %v1703
        %v1804 = vunpack.c.l.bf16 %v1704
        %v1805 = vmul.f32 %v1797, %v1803
        %v1806 = vmul.f32 %v1799, %v1804
        %v1807 = vadd.f32 %v1691, %v1805
        %v1808 = vadd.f32 %v1692, %v1806
        %vm1809 = vcmp.ge.s32.totalorder %v1103, 192
        %vm1810 = vcmp.ge.s32.totalorder %v1104, 192
        %vm1811 = vcmp.lt.s32.totalorder %v1103, 224
        %vm1812 = vcmp.lt.s32.totalorder %v1104, 224
        %vm1813 = vmand %vm1809, %vm1811
        %vm1814 = vmand %vm1810, %vm1812
        %v1815 = vsel %vm1813, 1, 0
        %v1816 = vsel %vm1814, 1, 0
        %v1817 = vcvt.s32.f32 %v1815
        %v1818 = vcvt.s32.f32 %v1816
        %v1819 = vpack.c.bf16 %v1817, %v1817
        %v1820 = vpack.c.bf16 %v1818, %v1818
        %v1821 = vmul.bf16 %v614, %v1819
        %v1822 = vmul.bf16 %v615, %v1820
        %1823 = vmatprep.subr.bf16.mxu0 %v858
        %1824 = vmatpush1.bf16.xpose.msra.mxu0 %v857
        %1825 = vmatprep.subr.bf16.mxu0 0
        %1826 = vmatpush1.bf16.xpose.msra.mxu0 0
        %1827 = vmatprep.subr.bf16.mxu0 0
        %1828 = vmatpush1.bf16.xpose.msra.mxu0 0
        %1829 = vmatprep.subr.bf16.mxu0 0
        %1830 = vmatpush1.bf16.xpose.msra.mxu0 0
        %1831 = vmatprep.subr.bf16.mxu0 0
        %1832 = vmatpush1.bf16.xpose.msra.mxu0 0
        %1833 = vmatprep.subr.bf16.mxu0 0
        %1834 = vmatpush1.bf16.xpose.msra.mxu0 0
        %1835 = vmatprep.subr.bf16.mxu0 0
        %1836 = vmatpush1.bf16.xpose.msra.mxu0 0
        %1837 = vmatprep.subr.bf16.mxu0 0
        %1838 = vmatpush1.bf16.xpose.msra.mxu0 0
        %1839 = vmatprep.subr.bf16.mxu0 0
        %1840 = vmatpush1.bf16.xpose.msra.mxu0 0
        %1841 = vmatprep.subr.bf16.mxu0 0
        %1842 = vmatpush1.bf16.xpose.msra.mxu0 0
        %1843 = vmatprep.subr.bf16.mxu0 0
        %1844 = vmatpush1.bf16.xpose.msra.mxu0 0
        %1845 = vmatprep.subr.bf16.mxu0 0
        %1846 = vmatpush1.bf16.xpose.msra.mxu0 0
        %1847 = vmatprep.subr.bf16.mxu0 0
        %1848 = vmatpush1.bf16.xpose.msra.mxu0 0
        %1849 = vmatprep.subr.bf16.mxu0 0
        %1850 = vmatpush1.bf16.xpose.msra.mxu0 0
        %1851 = vmatprep.subr.bf16.mxu0 0
        %1852 = vmatpush1.bf16.xpose.msra.mxu0 0
        %1853 = vmatprep.subr.bf16.mxu0 0
        %1854 = vmatpush1.bf16.xpose.msra.mxu0 0
        %1855 = vmatprep.mubr.bf16.mxu0 %v1822
        %1856 = vmatmul.mubr.bf16.gmra.mrb[0].mxu0 %v1821
        %v1857 = vpop.f32.mrb[0].mxu0
        %v1858 = vadd.f32 0.0, %v1857
        %v1859 = vpop.f32.mrb[0].mxu0
        %v1860 = vpop.f32.mrb[0].mxu0
        %v1861 = vpop.f32.mrb[0].mxu0
        %1862 = vdwg.mxu0
        %v1863 = vsel %vm1159, %v1858, -inf
        %1864 = vmax.xlane.f32.xlu0 %v1863
        %v1865 = vpop.xlane.xlu0 %1864
        %v1866 = vsub.f32 %v1858, %v1865
        %v1867 = vmul.f32 %v1866, 1.442695
        %v1868 = vpow.pop %v1867
        %v1869 = vsel %vm1159, %v1868, 0.0
        %1870 = vadd.xlane.f32.xlu0 %v1869
        %v1871 = vpop.xlane.xlu0 %1870
        %v1872 = vrcp.pop %v1871
        %v1873 = vmul.f32 %v1868, %v1872
        %v1874 = vpack.c.bf16 %v1873, %v1873
        %v1876 = vsel %vm1159, %v1874, 0
        %1878 = vmatprep.subr.bf16.mxu0 %v1180
        %1879 = vmatpush1.bf16.msra.mxu0 %v1177
        %1880 = vmatprep.subr.bf16.mxu0 0
        %1881 = vmatpush1.bf16.msra.mxu0 0
        %1882 = vmatprep.subr.bf16.mxu0 0
        %1883 = vmatpush1.bf16.msra.mxu0 0
        %1884 = vmatprep.subr.bf16.mxu0 0
        %1885 = vmatpush1.bf16.msra.mxu0 0
        %1886 = vmatprep.subr.bf16.mxu0 0
        %1887 = vmatpush1.bf16.msra.mxu0 0
        %1888 = vmatprep.subr.bf16.mxu0 0
        %1889 = vmatpush1.bf16.msra.mxu0 0
        %1890 = vmatprep.subr.bf16.mxu0 0
        %1891 = vmatpush1.bf16.msra.mxu0 0
        %1892 = vmatprep.subr.bf16.mxu0 0
        %1893 = vmatpush1.bf16.msra.mxu0 0
        %1894 = vmatprep.subr.bf16.mxu0 0
        %1895 = vmatpush1.bf16.msra.mxu0 0
        %1896 = vmatprep.subr.bf16.mxu0 0
        %1897 = vmatpush1.bf16.msra.mxu0 0
        %1898 = vmatprep.subr.bf16.mxu0 0
        %1899 = vmatpush1.bf16.msra.mxu0 0
        %1900 = vmatprep.subr.bf16.mxu0 0
        %1901 = vmatpush1.bf16.msra.mxu0 0
        %1902 = vmatprep.subr.bf16.mxu0 0
        %1903 = vmatpush1.bf16.msra.mxu0 0
        %1904 = vmatprep.subr.bf16.mxu0 0
        %1905 = vmatpush1.bf16.msra.mxu0 0
        %1906 = vmatprep.subr.bf16.mxu0 0
        %1907 = vmatpush1.bf16.msra.mxu0 0
        %1908 = vmatprep.subr.bf16.mxu0 0
        %1909 = vmatpush1.bf16.msra.mxu0 0
        %1910 = vmatprep.mubr.bf16.mxu0 0
        %1911 = vmatmul.mubr.bf16.gmra.mrb[0].mxu0 %v1876
        %v1912 = vpop.f32.mrb[0].mxu0
        %v1913 = vadd.f32 0.0, %v1912
        %v1914 = vpop.f32.mrb[0].mxu0
        %v1915 = vadd.f32 0.0, %v1914
        %v1916 = vpop.f32.mrb[0].mxu0
        %v1917 = vpop.f32.mrb[0].mxu0
        %1918 = vdwg.mxu0
        %v1919 = vunpack.c.l.bf16 %v1819
        %v1920 = vunpack.c.l.bf16 %v1820
        %v1921 = vmul.f32 %v1913, %v1919
        %v1922 = vmul.f32 %v1915, %v1920
        %v1923 = vadd.f32 %v1807, %v1921
        %v1924 = vadd.f32 %v1808, %v1922
        %vm1925 = vcmp.ge.s32.totalorder %v1103, 224
        %vm1926 = vcmp.ge.s32.totalorder %v1104, 224
        %vm1927 = vcmp.lt.s32.totalorder %v1103, 256
        %vm1928 = vcmp.lt.s32.totalorder %v1104, 256
        %vm1929 = vmand %vm1925, %vm1927
        %vm1930 = vmand %vm1926, %vm1928
        %v1931 = vsel %vm1929, 1, 0
        %v1932 = vsel %vm1930, 1, 0
        %v1933 = vcvt.s32.f32 %v1931
        %v1934 = vcvt.s32.f32 %v1932
        %v1935 = vpack.c.bf16 %v1933, %v1933
        %v1936 = vpack.c.bf16 %v1934, %v1934
        %v1937 = vmul.bf16 %v614, %v1935
        %v1938 = vmul.bf16 %v615, %v1936
        %1939 = vmatprep.subr.bf16.mxu0 %v858
        %1940 = vmatpush1.bf16.xpose.msra.mxu0 %v857
        %1941 = vmatprep.subr.bf16.mxu0 0
        %1942 = vmatpush1.bf16.xpose.msra.mxu0 0
        %1943 = vmatprep.subr.bf16.mxu0 0
        %1944 = vmatpush1.bf16.xpose.msra.mxu0 0
        %1945 = vmatprep.subr.bf16.mxu0 0
        %1946 = vmatpush1.bf16.xpose.msra.mxu0 0
        %1947 = vmatprep.subr.bf16.mxu0 0
        %1948 = vmatpush1.bf16.xpose.msra.mxu0 0
        %1949 = vmatprep.subr.bf16.mxu0 0
        %1950 = vmatpush1.bf16.xpose.msra.mxu0 0
        %1951 = vmatprep.subr.bf16.mxu0 0
        %1952 = vmatpush1.bf16.xpose.msra.mxu0 0
        %1953 = vmatprep.subr.bf16.mxu0 0
        %1954 = vmatpush1.bf16.xpose.msra.mxu0 0
        %1955 = vmatprep.subr.bf16.mxu0 0
        %1956 = vmatpush1.bf16.xpose.msra.mxu0 0
        %1957 = vmatprep.subr.bf16.mxu0 0
        %1958 = vmatpush1.bf16.xpose.msra.mxu0 0
        %1959 = vmatprep.subr.bf16.mxu0 0
        %1960 = vmatpush1.bf16.xpose.msra.mxu0 0
        %1961 = vmatprep.subr.bf16.mxu0 0
        %1962 = vmatpush1.bf16.xpose.msra.mxu0 0
        %1963 = vmatprep.subr.bf16.mxu0 0
        %1964 = vmatpush1.bf16.xpose.msra.mxu0 0
        %1965 = vmatprep.subr.bf16.mxu0 0
        %1966 = vmatpush1.bf16.xpose.msra.mxu0 0
        %1967 = vmatprep.subr.bf16.mxu0 0
        %1968 = vmatpush1.bf16.xpose.msra.mxu0 0
        %1969 = vmatprep.subr.bf16.mxu0 0
        %1970 = vmatpush1.bf16.xpose.msra.mxu0 0
        %1971 = vmatprep.mubr.bf16.mxu0 %v1938
        %1972 = vmatmul.mubr.bf16.gmra.mrb[0].mxu0 %v1937
        %v1973 = vpop.f32.mrb[0].mxu0
        %v1974 = vadd.f32 0.0, %v1973
        %v1975 = vpop.f32.mrb[0].mxu0
        %v1976 = vpop.f32.mrb[0].mxu0
        %v1977 = vpop.f32.mrb[0].mxu0
        %1978 = vdwg.mxu0
        %v1979 = vsel %vm1159, %v1974, -inf
        %1980 = vmax.xlane.f32.xlu0 %v1979
        %v1981 = vpop.xlane.xlu0 %1980
        %v1982 = vsub.f32 %v1974, %v1981
        %v1983 = vmul.f32 %v1982, 1.442695
        %v1984 = vpow.pop %v1983
        %v1985 = vsel %vm1159, %v1984, 0.0
        %1986 = vadd.xlane.f32.xlu0 %v1985
        %v1987 = vpop.xlane.xlu0 %1986
        %v1988 = vrcp.pop %v1987
        %v1989 = vmul.f32 %v1984, %v1988
        %v1990 = vpack.c.bf16 %v1989, %v1989
        %v1992 = vsel %vm1159, %v1990, 0
        %1994 = vmatprep.subr.bf16.mxu0 %v1180
        %1995 = vmatpush1.bf16.msra.mxu0 %v1177
        %1996 = vmatprep.subr.bf16.mxu0 0
        %1997 = vmatpush1.bf16.msra.mxu0 0
        %1998 = vmatprep.subr.bf16.mxu0 0
        %1999 = vmatpush1.bf16.msra.mxu0 0
        %2000 = vmatprep.subr.bf16.mxu0 0
        %2001 = vmatpush1.bf16.msra.mxu0 0
        %2002 = vmatprep.subr.bf16.mxu0 0
        %2003 = vmatpush1.bf16.msra.mxu0 0
        %2004 = vmatprep.subr.bf16.mxu0 0
        %2005 = vmatpush1.bf16.msra.mxu0 0
        %2006 = vmatprep.subr.bf16.mxu0 0
        %2007 = vmatpush1.bf16.msra.mxu0 0
        %2008 = vmatprep.subr.bf16.mxu0 0
        %2009 = vmatpush1.bf16.msra.mxu0 0
        %2010 = vmatprep.subr.bf16.mxu0 0
        %2011 = vmatpush1.bf16.msra.mxu0 0
        %2012 = vmatprep.subr.bf16.mxu0 0
        %2013 = vmatpush1.bf16.msra.mxu0 0
        %2014 = vmatprep.subr.bf16.mxu0 0
        %2015 = vmatpush1.bf16.msra.mxu0 0
        %2016 = vmatprep.subr.bf16.mxu0 0
        %2017 = vmatpush1.bf16.msra.mxu0 0
        %2018 = vmatprep.subr.bf16.mxu0 0
        %2019 = vmatpush1.bf16.msra.mxu0 0
        %2020 = vmatprep.subr.bf16.mxu0 0
        %2021 = vmatpush1.bf16.msra.mxu0 0
        %2022 = vmatprep.subr.bf16.mxu0 0
        %2023 = vmatpush1.bf16.msra.mxu0 0
        %2024 = vmatprep.subr.bf16.mxu0 0
        %2025 = vmatpush1.bf16.msra.mxu0 0
        %2026 = vmatprep.mubr.bf16.mxu0 0
        %2027 = vmatmul.mubr.bf16.gmra.mrb[0].mxu0 %v1992
        %v2028 = vpop.f32.mrb[0].mxu0
        %v2029 = vadd.f32 0.0, %v2028
        %v2030 = vpop.f32.mrb[0].mxu0
        %v2031 = vadd.f32 0.0, %v2030
        %v2032 = vpop.f32.mrb[0].mxu0
        %v2033 = vpop.f32.mrb[0].mxu0
        %2034 = vdwg.mxu0
        %v2035 = vunpack.c.l.bf16 %v1935
        %v2036 = vunpack.c.l.bf16 %v1936
        %v2037 = vmul.f32 %v2029, %v2035
        %v2038 = vmul.f32 %v2031, %v2036
        %v2039 = vadd.f32 %v1923, %v2037
        %v2040 = vadd.f32 %v1924, %v2038
        %v2041 = vpack.c.bf16 %v2039, %v2039
        %v2042 = vpack.c.bf16 %v2040, %v2040
        %v2043 = vld [vmem:[%s6] sm:$0xff]
        %v2044 = vld [vmem:[%s6 + $0x8] sm:$0xff]
        %v2045 = vld [vmem:[%s6 + $0x10] sm:$0xff]
        %v2046 = vld [vmem:[%s6 + $0x18] sm:$0xff]
        %v2047 = vld [vmem:[%s6 + $0x20] sm:$0xff]
        %v2048 = vld [vmem:[%s6 + $0x28] sm:$0xff]
        %v2049 = vld [vmem:[%s6 + $0x30] sm:$0xff]
        %v2050 = vld [vmem:[%s6 + $0x38] sm:$0xff]
        %v2051 = vld [vmem:[%s6 + $0x40] sm:$0xff]
        %v2052 = vld [vmem:[%s6 + $0x48] sm:$0xff]
        %v2053 = vld [vmem:[%s6 + $0x50] sm:$0xff]
        %v2054 = vld [vmem:[%s6 + $0x58] sm:$0xff]
        %v2055 = vld [vmem:[%s6 + $0x60] sm:$0xff]
        %v2056 = vld [vmem:[%s6 + $0x68] sm:$0xff]
        %v2057 = vld [vmem:[%s6 + $0x70] sm:$0xff]
        %v2058 = vld [vmem:[%s6 + $0x78] sm:$0xff]
        %v2059 = vld [vmem:[%s6 + $0x80] sm:$0xff]
        %v2060 = vld [vmem:[%s6 + $0x88] sm:$0xff]
        %v2061 = vld [vmem:[%s6 + $0x90] sm:$0xff]
        %v2062 = vld [vmem:[%s6 + $0x98] sm:$0xff]
        %v2063 = vld [vmem:[%s6 + $0xa0] sm:$0xff]
        %v2064 = vld [vmem:[%s6 + $0xa8] sm:$0xff]
        %v2065 = vld [vmem:[%s6 + $0xb0] sm:$0xff]
        %v2066 = vld [vmem:[%s6 + $0xb8] sm:$0xff]
        %v2067 = vld [vmem:[%s6 + $0xc0] sm:$0xff]
        %v2068 = vld [vmem:[%s6 + $0xc8] sm:$0xff]
        %v2069 = vld [vmem:[%s6 + $0xd0] sm:$0xff]
        %v2070 = vld [vmem:[%s6 + $0xd8] sm:$0xff]
        %v2071 = vld [vmem:[%s6 + $0xe0] sm:$0xff]
        %v2072 = vld [vmem:[%s6 + $0xe8] sm:$0xff]
        %v2073 = vld [vmem:[%s6 + $0xf0] sm:$0xff]
        %v2074 = vld [vmem:[%s6 + $0xf8] sm:$0xff]
        %v2075 = vld [vmem:[%s7] sm:$0x3]
        %v2077 = vlaneseq
        %v2078 = vshrl.u32 %v2077, 7
        %v2079 = vsub.s32 0, %v2078
        %v2080 = vrot.slane %v2075, %v2079
        %v2081 = vlaneseq
        %v2082 = vshrl.u32 %v2081, 7
        %v2083 = vsub.s32 1, %v2082
        %v2084 = vrot.slane %v2075, %v2083
        %v2119 = vunpack.c.l.b16 %v2043
        %v2120 = vunpack.c.h.b16 %v2043
        %v2121 = vunpack.c.l.b16 %v2044
        %v2122 = vunpack.c.h.b16 %v2044
        %v2123 = vunpack.c.l.b16 %v2045
        %v2124 = vunpack.c.h.b16 %v2045
        %v2125 = vunpack.c.l.b16 %v2046
        %v2126 = vunpack.c.h.b16 %v2046
        %v2127 = vunpack.c.l.b16 %v2047
        %v2128 = vunpack.c.h.b16 %v2047
        %v2129 = vunpack.c.l.b16 %v2048
        %v2130 = vunpack.c.h.b16 %v2048
        %v2131 = vunpack.c.l.b16 %v2049
        %v2132 = vunpack.c.h.b16 %v2049
        %v2133 = vunpack.c.l.b16 %v2050
        %v2134 = vunpack.c.h.b16 %v2050
        %v2135 = vunpack.c.l.b16 %v2051
        %v2136 = vunpack.c.h.b16 %v2051
        %v2137 = vunpack.c.l.b16 %v2052
        %v2138 = vunpack.c.h.b16 %v2052
        %v2139 = vunpack.c.l.b16 %v2053
        %v2140 = vunpack.c.h.b16 %v2053
        %v2141 = vunpack.c.l.b16 %v2054
        %v2142 = vunpack.c.h.b16 %v2054
        %v2143 = vunpack.c.l.b16 %v2055
        %v2144 = vunpack.c.h.b16 %v2055
        %v2145 = vunpack.c.l.b16 %v2056
        %v2146 = vunpack.c.h.b16 %v2056
        %v2147 = vunpack.c.l.b16 %v2057
        %v2148 = vunpack.c.h.b16 %v2057
        %v2149 = vunpack.c.l.b16 %v2058
        %v2150 = vunpack.c.h.b16 %v2058
        %v2151 = vunpack.c.l.b16 %v2059
        %v2152 = vunpack.c.h.b16 %v2059
        %v2153 = vunpack.c.l.b16 %v2060
        %v2154 = vunpack.c.h.b16 %v2060
        %v2155 = vunpack.c.l.b16 %v2061
        %v2156 = vunpack.c.h.b16 %v2061
        %v2157 = vunpack.c.l.b16 %v2062
        %v2158 = vunpack.c.h.b16 %v2062
        %v2159 = vunpack.c.l.b16 %v2063
        %v2160 = vunpack.c.h.b16 %v2063
        %v2161 = vunpack.c.l.b16 %v2064
        %v2162 = vunpack.c.h.b16 %v2064
        %v2163 = vunpack.c.l.b16 %v2065
        %v2164 = vunpack.c.h.b16 %v2065
        %v2165 = vunpack.c.l.b16 %v2066
        %v2166 = vunpack.c.h.b16 %v2066
        %v2167 = vunpack.c.l.b16 %v2067
        %v2168 = vunpack.c.h.b16 %v2067
        %v2169 = vunpack.c.l.b16 %v2068
        %v2170 = vunpack.c.h.b16 %v2068
        %v2171 = vunpack.c.l.b16 %v2069
        %v2172 = vunpack.c.h.b16 %v2069
        %v2173 = vunpack.c.l.b16 %v2070
        %v2174 = vunpack.c.h.b16 %v2070
        %v2175 = vunpack.c.l.b16 %v2071
        %v2176 = vunpack.c.h.b16 %v2071
        %v2177 = vunpack.c.l.b16 %v2072
        %v2178 = vunpack.c.h.b16 %v2072
        %v2179 = vunpack.c.l.b16 %v2073
        %v2180 = vunpack.c.h.b16 %v2073
        %v2181 = vunpack.c.l.b16 %v2074
        %v2182 = vunpack.c.h.b16 %v2074
        %v2183 = vpack.c.b16 %v2121, %v2119
        %v2184 = vpack.c.b16 %v2122, %v2120
        %v2185 = vpack.c.b16 %v2125, %v2123
        %v2186 = vpack.c.b16 %v2126, %v2124
        %v2187 = vpack.c.b16 %v2129, %v2127
        %v2188 = vpack.c.b16 %v2130, %v2128
        %v2189 = vpack.c.b16 %v2133, %v2131
        %v2190 = vpack.c.b16 %v2134, %v2132
        %v2191 = vpack.c.b16 %v2137, %v2135
        %v2192 = vpack.c.b16 %v2138, %v2136
        %v2193 = vpack.c.b16 %v2141, %v2139
        %v2194 = vpack.c.b16 %v2142, %v2140
        %v2195 = vpack.c.b16 %v2145, %v2143
        %v2196 = vpack.c.b16 %v2146, %v2144
        %v2197 = vpack.c.b16 %v2149, %v2147
        %v2198 = vpack.c.b16 %v2150, %v2148
        %v2199 = vpack.c.b16 %v2153, %v2151
        %v2200 = vpack.c.b16 %v2154, %v2152
        %v2201 = vpack.c.b16 %v2157, %v2155
        %v2202 = vpack.c.b16 %v2158, %v2156
        %v2203 = vpack.c.b16 %v2161, %v2159
        %v2204 = vpack.c.b16 %v2162, %v2160
        %v2205 = vpack.c.b16 %v2165, %v2163
        %v2206 = vpack.c.b16 %v2166, %v2164
        %v2207 = vpack.c.b16 %v2169, %v2167
        %v2208 = vpack.c.b16 %v2170, %v2168
        %v2209 = vpack.c.b16 %v2173, %v2171
        %v2210 = vpack.c.b16 %v2174, %v2172
        %v2211 = vpack.c.b16 %v2177, %v2175
        %v2212 = vpack.c.b16 %v2178, %v2176
        %v2213 = vpack.c.b16 %v2181, %v2179
        %v2214 = vpack.c.b16 %v2182, %v2180
        %2247 = vmatprep.subr.bf16.mxu0 %v2184
        %2248 = vmatpush1.bf16.msra.mxu0 %v2183
        %2249 = vmatprep.subr.bf16.mxu0 %v2186
        %2250 = vmatpush1.bf16.msra.mxu0 %v2185
        %2251 = vmatprep.subr.bf16.mxu0 %v2188
        %2252 = vmatpush1.bf16.msra.mxu0 %v2187
        %2253 = vmatprep.subr.bf16.mxu0 %v2190
        %2254 = vmatpush1.bf16.msra.mxu0 %v2189
        %2255 = vmatprep.subr.bf16.mxu0 %v2192
        %2256 = vmatpush1.bf16.msra.mxu0 %v2191
        %2257 = vmatprep.subr.bf16.mxu0 %v2194
        %2258 = vmatpush1.bf16.msra.mxu0 %v2193
        %2259 = vmatprep.subr.bf16.mxu0 %v2196
        %2260 = vmatpush1.bf16.msra.mxu0 %v2195
        %2261 = vmatprep.subr.bf16.mxu0 %v2198
        %2262 = vmatpush1.bf16.msra.mxu0 %v2197
        %2263 = vmatprep.subr.bf16.mxu0 %v2200
        %2264 = vmatpush1.bf16.msra.mxu0 %v2199
        %2265 = vmatprep.subr.bf16.mxu0 %v2202
        %2266 = vmatpush1.bf16.msra.mxu0 %v2201
        %2267 = vmatprep.subr.bf16.mxu0 %v2204
        %2268 = vmatpush1.bf16.msra.mxu0 %v2203
        %2269 = vmatprep.subr.bf16.mxu0 %v2206
        %2270 = vmatpush1.bf16.msra.mxu0 %v2205
        %2271 = vmatprep.subr.bf16.mxu0 %v2208
        %2272 = vmatpush1.bf16.msra.mxu0 %v2207
        %2273 = vmatprep.subr.bf16.mxu0 %v2210
        %2274 = vmatpush1.bf16.msra.mxu0 %v2209
        %2275 = vmatprep.subr.bf16.mxu0 %v2212
        %2276 = vmatpush1.bf16.msra.mxu0 %v2211
        %2277 = vmatprep.subr.bf16.mxu0 %v2214
        %2278 = vmatpush1.bf16.msra.mxu0 %v2213
        %2279 = vmatprep.mubr.bf16.mxu0 %v2042
        %2280 = vmatmul.mubr.bf16.gmra.mrb[0].mxu0 %v2041
        %v2281 = vpop.f32.mrb[0].mxu0
        %v2282 = vadd.f32 %v2080, %v2281
        %v2283 = vpop.f32.mrb[0].mxu0
        %v2284 = vadd.f32 %v2084, %v2283
        %v2285 = vpop.f32.mrb[0].mxu0
        %v2286 = vpop.f32.mrb[0].mxu0
        %2287 = vdwg.mxu0
        %2288 = vst [vmem:[%s352] sm:$0xff] %v2282
        %2289 = vst [vmem:[%s352 + $0x8] sm:$0xff] %v2284
        %s2290 = sand.u32 %s229, 1
        %s2291 = scalar_lea.sflag [#allocation3], %s2290
        %s2292 = sand.u32 %s229, 1
        %s2293 = smul.addr %s2292, 16
        %s2294 = scalar_lea.vmem [#allocation2], %s2293
        // Predicated region
        $region53: #{self_attention_pallas.1} parent=51 // pred_check
          %p2295 = pneg %p239
        $region54: #{self_attention_pallas.1} parent=51 // pred_check_branch
          %2297 = sbr.rel (%p2295) target = $region56
        $region55: #{self_attention_pallas.1} parent=51 // pred_region
          %s2299 = ssub.s32 256, 256
          %2300 = vsyncadd %s2291, %s2299
          %s2301 = smul.addr %s27, 2
          %s2302 = smul.addr %s26, 2
          %s2303 = sadd.s32 %s2301, %s2302
          %s2304 = smul.addr %s2303, 128
          %s2305 = scalar_lea.hbm %s8, %s2304
          %s2307 = sshll.u32 %s2294, 4
          %s2308 = int_to_ptr.vmem [resolvable:$true] %s2307
          %2310 = dma.vmem_to_hbm [thread:$0]  %s2308, 256, %s2305, %s2291
        $region56: #{self_attention_pallas.1} parent=51 // pred_fallthru
          _
      $region52: #{self_attention_pallas.1} parent=5 // pred_fallthru
        _
      %p2311 = scmp.le.s32.totalorder 2, %s17
      // Predicated region
      $region57: #{self_attention_pallas.1} parent=5 // pred_check
        %p2312 = pneg %p2311
      $region58: #{self_attention_pallas.1} parent=5 // pred_check_branch
        %2314 = sbr.rel (%p2312) target = $region60
      $region59: #{self_attention_pallas.1} parent=5 // pred_region
        %s2315 = ssub.s32 %s17, 2
        // Predicated region
        $region61: #{self_attention_pallas.1} parent=59 // pred_check
          %p2316 = pneg %p245
        $region62: #{self_attention_pallas.1} parent=59 // pred_check_branch
          %2318 = sbr.rel (%p2316) target = $region64
        $region63: #{self_attention_pallas.1} parent=59 // pred_region
          %s2319 = sand.u32 %s230, 1
          %s2320 = scalar_lea.sflag [#allocation3], %s2319
          %s2321 = sand.u32 %s230, 1
          %s2322 = smul.addr %s2321, 16
          %s2323 = scalar_lea.vmem [#allocation2], %s2322
          %2324 = dma.done %s2320, 256
        $region64: #{self_attention_pallas.1} parent=59 // pred_fallthru
          _
      $region60: #{self_attention_pallas.1} parent=5 // pred_fallthru
        _
    $region6: #{self_attention_pallas.1} parent=1 // loop_footer
      %s21 = sadd.s32 1, %s17
    $region7: #{self_attention_pallas.1} parent=1 // loop_footer_branch
      %16 = sbr.rel target = $region3
    $region8: #{self_attention_pallas.1} parent=1 // loop_exit
      _
    %2325 = vsyncpa [#allocation3], 1
    %s2326 = scalar_lea.sflag [#allocation3], 1
    %2327 = vsyncpa %s2326, 1

</llo_original>
